<compile_context>
chip_gen: v5e
topology: v5e:2x2
jax: 0.10.0
libtpu: 0.0.40
codegen_flags: <defaults>
</compile_context>

<pallas_src>
import functools
import itertools
import math

import numpy as np
import jax
import jax.numpy as jnp
from jax.experimental import pallas as pl
from jax.experimental.pallas import tpu as pltpu

# ----------------------------------------------------------------------------
# Projective geometric algebra G(3,0,1) tables (16-dim multivectors)
# Basis order (grade-major, lexicographic within grade):
# [1, e0,e1,e2,e3, e01,e02,e03,e12,e13,e23, e012,e013,e023,e123, e0123]
# ----------------------------------------------------------------------------
_METRIC = (0.0, 1.0, 1.0, 1.0)   # e0^2 = 0 (degenerate), e1^2 = e2^2 = e3^2 = 1


def _blades():
    out = []
    for g in range(5):
        out.extend(itertools.combinations(range(4), g))
    return out


_BLADES = _blades()
_BLADE_IDX = {b: i for i, b in enumerate(_BLADES)}
GRADE_OF = np.array([len(b) for b in _BLADES], dtype=np.int32)
SUBSPACES = np.array([math.comb(4, i) for i in range(5)])
MOTOR_IDX = np.array([i for i, b in enumerate(_BLADES) if len(b) % 2 == 0])  # 8 even comps


def _sort_sign(seq):
    seq = list(seq)
    sign = 1
    for i in range(1, len(seq)):
        j = i
        while j > 0 and seq[j - 1] > seq[j]:
            seq[j - 1], seq[j] = seq[j], seq[j - 1]
            sign = -sign
            j -= 1
    return sign, seq


def _gp_blades(a, b):
    sign, seq = _sort_sign(list(a) + list(b))
    out, i = [], 0
    while i < len(seq):
        if i + 1 < len(seq) and seq[i] == seq[i + 1]:
            m = _METRIC[seq[i]]
            if m == 0.0:
                return 0.0, ()
            sign *= m
            i += 2
        else:
            out.append(seq[i])
            i += 1
    return float(sign), tuple(out)


def _wedge_blades(a, b):
    if set(a) & set(b):
        return 0.0, ()
    sign, seq = _sort_sign(list(a) + list(b))
    return float(sign), tuple(seq)


def _build_tables():
    gp = np.zeros((16, 16, 16), np.float32)
    wedge = np.zeros((16, 16, 16), np.float32)
    for j, bj in enumerate(_BLADES):
        for k, bk in enumerate(_BLADES):
            s, res = _gp_blades(bj, bk)
            if s != 0.0:
                gp[_BLADE_IDX[res], j, k] += s
            s, res = _wedge_blades(bj, bk)
            if s != 0.0:
                wedge[_BLADE_IDX[res], j, k] += s
    # right-complement dual (signed permutation)
    D = np.zeros((16, 16), np.float32)
    for i, b in enumerate(_BLADES):
        comp = tuple(sorted(set(range(4)) - set(b)))
        sign, _ = _sort_sign(list(b) + list(comp))
        D[_BLADE_IDX[comp], i] = sign
    Dinv = D.T
    # join ("regressive product"): undual(dual(x) ^ dual(y))
    join = np.einsum('ip,pqr,qj,rk->ijk', Dinv, wedge, D, D).astype(np.float32)
    return gp, join


_GP_NP, _JOIN_NP = _build_tables()
GP = jnp.asarray(_GP_NP)
JOIN = jnp.asarray(_JOIN_NP)
_REV_NP = np.array([(-1.0) ** (int(g) * (int(g) - 1) // 2) for g in GRADE_OF], np.float32)
REV_SIGNS = jnp.asarray(_REV_NP)
NONDEG_MASK = jnp.asarray([0.0 if 0 in b else 1.0 for b in _BLADES], jnp.float32)
DEG_MASK = 1.0 - NONDEG_MASK

# Flat nonzero-term list of the geometric product (all coefficients are +-1):
# _GP_TERMS[i] = [(j, k, c), ...] such that GP(a,b)_i = sum c * a_j * b_k.
_GP_TERMS = [[] for _ in range(16)]
for _j in range(16):
    for _k in range(16):
        for _i in range(16):
            _c = float(_GP_NP[_i, _j, _k])
            if _c != 0.0:
                _GP_TERMS[_i].append((_j, _k, _c))


def _grade_paths(table):
    slices, start = [], 0
    for g in range(5):
        slices.append(slice(start, start + int(SUBSPACES[g])))
        start += int(SUBSPACES[g])
    paths = np.zeros((5, 5, 5), bool)
    for i in range(5):
        for j in range(5):
            for k in range(5):
                paths[i, j, k] = np.any(table[slices[i], slices[j], slices[k]] != 0)
    return paths


GP_PATHS = _grade_paths(_GP_NP)
JOIN_PATHS = _grade_paths(_JOIN_NP)
GP_PATH_IDX = np.nonzero(GP_PATHS)
JOIN_PATH_IDX = np.nonzero(JOIN_PATHS)

# ----------------------------------------------------------------------------
# GA operations (plain JAX glue)
# ----------------------------------------------------------------------------
def geometric_product(a, b):
    return jnp.einsum('ijk,...j,...k->...i', GP, a, b)


def efficient_join(a, b):
    return jnp.einsum('ijk,...j,...k->...i', JOIN, a, b)


def reverse_mv(x):
    return x * REV_SIGNS


def apply_versor(x, T):
    return geometric_product(geometric_product(T, x), reverse_mv(T))


def apply_inverse_versor(x, T):
    # plain-JAX reference for the spec module
    return geometric_product(geometric_product(reverse_mv(T), x), T)


def embed_point(x):  # x: [..., 3] euclidean point -> PGA trivector
    mv = jnp.zeros(x.shape[:-1] + (16,), x.dtype)
    mv = mv.at[..., 14].set(1.0)            # e123
    mv = mv.at[..., 13].set(-x[..., 0])     # e023
    mv = mv.at[..., 12].set(x[..., 1])      # e013
    mv = mv.at[..., 11].set(-x[..., 2])     # e012
    return mv


def apply_point_versor(x, T8):
    # TODO(synk): homogeneous-coordinate convention of pu.apply_point_versor assumed [x,y,z,1];
    #             no guard against w ~ 0 (degenerate motor), matching the direct divide.
    Tm = jnp.zeros(T8.shape[:-1] + (16,), T8.dtype).at[..., MOTOR_IDX].set(T8)
    out = apply_versor(embed_point(x), Tm)
    w = out[..., 14:15]
    coords = jnp.concatenate([-out[..., 13:14], out[..., 12:13], -out[..., 11:12]], axis=-1) / w
    return jnp.concatenate([coords, jnp.ones_like(coords[..., :1])], axis=-1)


def relative_frame_transformation(T):
    # TODO(synk): exact convention of pu.relative_frame_transformation unknown; uses ~T_i * T_j.
    return jnp.einsum('ijk,...nj,...mk->...nmi', GP, reverse_mv(T), T)


def equi_linear(w, x):
    # TODO(synk): library EquiLinear/MVLinear may add e0-homomorphism maps; grade-wise mixing only.
    w16 = w[..., GRADE_OF]                          # [out, in, 16]
    return jnp.einsum('oic,...ic->...oc', w16, x), None


def equi_layer_norm(x, channel_axis=-2, eps=0.01):
    sq = jnp.sum((x ** 2) * NONDEG_MASK, axis=-1, keepdims=True)
    denom = jnp.sqrt(jnp.mean(sq, axis=channel_axis, keepdims=True) + eps)
    return x / denom


def ga_norm_fn(x, eps=1e-12):
    n = jnp.sqrt(jnp.sum((x ** 2) * NONDEG_MASK, axis=-1) + eps)
    i = jnp.sqrt(jnp.sum((x ** 2) * DEG_MASK, axis=-1) + eps)
    return n, i


def gmbc_weight(gp_w, jp_w):
    nf = gp_w.shape[0]
    gdense = jnp.zeros((nf, 5, 5, 5), gp_w.dtype).at[
        :, GP_PATH_IDX[0], GP_PATH_IDX[1], GP_PATH_IDX[2]].set(gp_w)
    jdense = jnp.zeros((nf, 5, 5, 5), jp_w.dtype).at[
        :, JOIN_PATH_IDX[0], JOIN_PATH_IDX[1], JOIN_PATH_IDX[2]].set(jp_w)
    g16 = gdense[:, GRADE_OF[:, None, None], GRADE_OF[None, :, None], GRADE_OF[None, None, :]]
    j16 = jdense[:, GRADE_OF[:, None, None], GRADE_OF[None, :, None], GRADE_OF[None, None, :]]
    return GP[None] * g16 + JOIN[None] * j16


def gmbc(params, x):                                # GMBCLayer forward, x: [..., nf, 16]
    nf = params['gp_w'].shape[0]
    W = gmbc_weight(params['gp_w'], params['jp_w'])
    x2, _ = equi_linear(params['mv'], x)            # [..., 2*nf, 16]
    xl, xr = x2[..., :nf, :], x2[..., nf:, :]
    return jnp.einsum('nijk,...nj,...nk->...ni', W, xl, xr) + xr


def pairwise_bilinear(params, mv1, mv2, oce):       # PairwiseGeometricBilinear forward
    l, _ = equi_linear(params['wl'], mv1)
    r, _ = equi_linear(params['wr'], mv2)
    gp_out = geometric_product(l[..., :oce, :], r[..., :oce, :])
    join_out = efficient_join(l[..., oce:, :], r[..., oce:, :])
    out = jnp.concatenate([gp_out, join_out], axis=-2)
    out, _ = equi_linear(params['wout'], out)
    return out


# ----------------------------------------------------------------------------
# Generation-aware VMEM query
# ----------------------------------------------------------------------------
def _tpu_vmem_capacity_bytes():
    """Physical VMEM per core; conservative 64 MiB (v7x) fallback if the query fails."""
    try:
        info = pltpu.get_tpu_info()
        for attr in ("vmem_capacity_bytes", "vmem_size_bytes", "vmem_bytes"):
            v = getattr(info, attr, None)
            if v:
                return int(v)
    except Exception:
        pass
    return 64 * 2 ** 20


# ----------------------------------------------------------------------------
# Pallas kernel #1: the spec module -- ga_inverse_versor: x -> GP(GP(~T, x), T)
# Layout: (16, rows, 128) f32 -- each multivector component is a dense (8,128)-tiled
# slab (1 vreg per component per grid step), outputs written per-component.
# ----------------------------------------------------------------------------
_IV_ROWS = 8      # sublane rows per grid step -> exactly one vreg per component
_IV_LANES = 128


def _inverse_versor_kernel(x_ref, t_ref, o_ref):
    # x_ref / t_ref / o_ref: (16, _IV_ROWS, _IV_LANES) f32
    x = [x_ref[i] for i in range(16)]            # 16 dense (8,128) slabs
    t = [t_ref[i] for i in range(16)]
    # tmp = GP(reverse(T), x) -- coefficients are all +-1, unrolled as VPU FMAs
    tmp = []
    for i in range(16):
        acc = jnp.zeros_like(x[0])
        for (j, k, c) in _GP_TERMS[i]:
            term = t[j] * x[k]
            if c * float(_REV_NP[j]) > 0.0:
                acc = acc + term
            else:
                acc = acc - term
        tmp.append(acc)
    # out = GP(tmp, T); store each component immediately (no 16-way sublane concat)
    for i in range(16):
        acc = jnp.zeros_like(x[0])
        for (j, k, c) in _GP_TERMS[i]:
            term = tmp[j] * t[k]
            if c > 0.0:
                acc = acc + term
            else:
                acc = acc - term
        o_ref[i] = acc.astype(o_ref.dtype)


def ga_inverse_versor(x, T):
    """Pallas implementation of the ga_inverse_versor module: apply_inverse_versor(x, T)."""
    shp = jnp.broadcast_shapes(x.shape, T.shape)
    x_b = jnp.broadcast_to(x, shp).astype(jnp.float32)
    # TODO(synk): T is still materialized at the broadcast extent; see header TODO about a
    #             per-frame SMEM path for large inner repeats.
    T_b = jnp.broadcast_to(T, shp).astype(jnp.float32)
    M = int(np.prod(shp[:-1], dtype=np.int64))
    tile_elems = _IV_ROWS * _IV_LANES
    Mp = ((M + tile_elems - 1) // tile_elems) * tile_elems

    def to_slab(a):
        a2 = a.reshape(M, 16)
        if Mp != M:
            a2 = jnp.pad(a2, ((0, Mp - M), (0, 0)))
        return a2.T.reshape(16, Mp // _IV_LANES, _IV_LANES)

    xs, ts = to_slab(x_b), to_slab(T_b)
    Rm = Mp // _IV_LANES
    out = pl.pallas_call(
        _inverse_versor_kernel,
        out_shape=jax.ShapeDtypeStruct((16, Rm, _IV_LANES), jnp.float32),
        grid=(Rm // _IV_ROWS,),
        in_specs=[pl.BlockSpec((16, _IV_ROWS, _IV_LANES), lambda i: (0, i, 0)),
                  pl.BlockSpec((16, _IV_ROWS, _IV_LANES), lambda i: (0, i, 0))],
        out_specs=pl.BlockSpec((16, _IV_ROWS, _IV_LANES), lambda i: (0, i, 0)),
        compiler_params=pltpu.CompilerParams(dimension_semantics=("parallel",)),
    )(xs, ts)
    return out.reshape(16, Mp).T[:M].reshape(shp)


# ----------------------------------------------------------------------------
# Pallas kernel #2: head-fused, query-tiled GFA attention.
# Grid = (batch, query_tile); all H heads per step; merged value slab [v || vg],
# merged pair/relative-frame slab [pz || vr], single lane-contiguous output slab.
# ----------------------------------------------------------------------------
def _gfa_attn_kernel(qc_ref, kc_ref, vcat_ref, bias_ref, pzvr_ref, out_ref, *, num_heads):
    H = num_heads
    pzvr = pzvr_ref[...]                      # (tq, Cz+16, N) bf16 -- NO f32 promotion

    main_parts, pair_parts = [], []
    for h in range(H):                         # static, unrolled head loop
        qh = qc_ref[h]                         # (tq, C + 3*Pqk) bf16 (q pre-scaled)
        kh = kc_ref[h]                         # (C + 3*Pqk, N)  bf16 (pre-transposed)

        # Fused scalar-QK + point cross-term: ONE MXU matmul over K = C + 3*Pqk.
        # bias_ref already holds sqrt(1/3)*pair_bias + mask - 0.5*(|q_pt|^2 + |k_pt|^2)
        logits = jnp.dot(qh, kh, preferred_element_type=jnp.float32)           # (tq, N)
        logits = logits + bias_ref[h].astype(jnp.float32)

        # softmax over keys (f32 math, reciprocal on the EUP)
        m = jnp.max(logits, axis=-1, keepdims=True)
        e = jnp.exp(logits - m)
        a = e * pl.reciprocal(jnp.sum(e, axis=-1, keepdims=True), approx=True)  # (tq, N)
        a16 = a.astype(jnp.bfloat16)

        # merged value matmul: [o_h || o_pt_h], width C+Dv (one MXU op per head)
        main_parts.append(jnp.dot(a16, vcat_ref[h], preferred_element_type=jnp.float32))

        # merged pz/vr contraction over keys: bf16 multiply, f32 accumulate (lane-reduce)
        pair_parts.append(jnp.sum(a16[:, None, :] * pzvr, axis=-1, dtype=jnp.float32))

    # One lane-contiguous output slab: [ per-head (o||o_pt) | per-head (o_pair||v_rel) ]
    out_ref[...] = jnp.concatenate(main_parts + pair_parts, axis=-1).astype(out_ref.dtype)


def _vmem_tile_bytes(shape, dtype):
    dt = jnp.dtype(dtype)
    sub = 8 * (4 // dt.itemsize)
    lead = int(np.prod(shape[:-2], dtype=np.int64)) if len(shape) > 2 else 1
    rows = -(-int(shape[-2]) // sub) * sub
    cols = -(-int(shape[-1]) // 128) * 128
    return lead * rows * cols * dt.itemsize


def gfa_attention_pallas(qcat, kcat_t, vcat, bias, pzvr, *, tq):
    B, H, N, CC = qcat.shape
    CpD = vcat.shape[-1]           # C + Dv
    CzP = pzvr.shape[2]            # Cz + 16
    OUT = H * (CpD + CzP)
    assert N % tq == 0             # TODO(synk): pad / key-tile for ragged N
    nq = N // tq

    bh_q = lambda b, qi: (b, 0, qi, 0)
    bh_full = lambda b, qi: (b, 0, 0, 0)
    b_q3 = lambda b, qi: (b, qi, 0)
    b_q4 = lambda b, qi: (b, qi, 0, 0)

    in_specs = [
        pl.BlockSpec((None, H, tq, CC), bh_q),     # [q/sqrt(3C) || q-points] (bf16)
        # TODO(synk): pipeline_mode=pl.Buffered(1) on kcat/vcat for v7x (batch-invariant per q-tile)
        pl.BlockSpec((None, H, CC, N), bh_full),   # [k || k-points]^T, keys in lanes (bf16)
        pl.BlockSpec((None, H, N, CpD), bh_full),  # merged [v || vg] values (bf16)
        pl.BlockSpec((None, H, tq, N), bh_q),      # folded bias (bf16)
        pl.BlockSpec((None, tq, CzP, N), b_q4),    # merged [pz || vr], keys in lanes (bf16)
    ]
    out_specs = pl.BlockSpec((None, tq, OUT), b_q3)
    out_shape = jax.ShapeDtypeStruct((B, N, OUT), jnp.float32)

    # VMEM budget: double-buffered input tiles + output tile + in-kernel temporaries.
    bf = jnp.bfloat16
    est = 2 * (_vmem_tile_bytes((H, tq, CC), bf) + _vmem_tile_bytes((H, CC, N), bf)
               + _vmem_tile_bytes((H, N, CpD), bf) + _vmem_tile_bytes((H, tq, N), bf)
               + _vmem_tile_bytes((tq, CzP, N), bf)
               + _vmem_tile_bytes((tq, OUT), jnp.float32))
    est += (4 * _vmem_tile_bytes((tq, N), jnp.float32)            # logits/e/a/a16
            + _vmem_tile_bytes((tq, CzP, N), bf)                  # bf16 product temp
            + H * (_vmem_tile_bytes((tq, CpD), jnp.float32)
                   + _vmem_tile_bytes((tq, CzP), jnp.float32)))
    cap = _tpu_vmem_capacity_bytes()
    vmem_limit = int(min(int(0.85 * cap), max(32 * 2 ** 20, 2 * est)))

    kernel = functools.partial(_gfa_attn_kernel, num_heads=H)
    return pl.pallas_call(
        kernel,
        out_shape=out_shape,
        grid_spec=pltpu.PrefetchScalarGridSpec(
            num_scalar_prefetch=0,
            grid=(B, nq),
            in_specs=in_specs,
            out_specs=out_specs),
        compiler_params=pltpu.CompilerParams(
            dimension_semantics=("parallel", "parallel"),   # batch + q-tiles: both TC-shardable
            vmem_limit_bytes=vmem_limit),
    )(qcat, kcat_t, vcat, bias, pzvr)


def _pick_query_tile(N):
    if N <= 128:
        return N
    cap = _tpu_vmem_capacity_bytes()
    if cap >= 100 * 2 ** 20 and N % 256 == 0:
        return 256                       # v5e / v6e: 128 MiB VMEM -> larger q tiles
    if N % 128 == 0:
        return 128
    return N                             # TODO(synk): pad the query axis instead


# ----------------------------------------------------------------------------
# Parameters (deterministic synthetic init; shapes follow the module __init__)
# ----------------------------------------------------------------------------
def _dense(key, out_dim, in_dim):
    return {"w": (1.0 / math.sqrt(in_dim)) * jax.random.normal(key, (out_dim, in_dim), jnp.float32),
            "b": jnp.zeros((out_dim,), jnp.float32)}


def _equi(key, out_ch, in_ch):
    return (1.0 / math.sqrt(in_ch)) * jax.random.normal(key, (out_ch, in_ch, 5), jnp.float32)


def init_params(key, cfg):
    c_s, c_z = cfg['c_s'], cfg['c_z']
    C, H = cfg['c_hidden'], cfg['no_heads']
    Pqk, Pv = cfg['no_qk_points'], cfg['no_v_points']
    hc = C * H
    nf = H * Pv
    oce = Pv // 2
    keys = jax.random.split(key, 16)
    softplus_inv_1 = 0.541324854612918
    concat_out_dim = c_z // 4 + C + 8 + Pv * 18
    return {
        'linear_q': _dense(keys[0], hc, c_s),
        'linear_kv': _dense(keys[1], 2 * hc, c_s),
        'linear_q_points': _dense(keys[2], H * Pqk * 3, c_s),
        'linear_k_points': _dense(keys[3], H * Pqk * 3, c_s),
        'linear_v_g': _dense(keys[4], Pv * 16, c_s),
        'merge_geometric': _equi(keys[5], H * Pv, 2 * Pv),
        'linear_b': _dense(keys[6], H, c_z),
        'down_z': _dense(keys[7], c_z // 4, c_z),
        'head_weights': jnp.full((H,), softplus_inv_1, jnp.float32),   # gfa_point_weights_init_
        'bilinear_v': {'wl': _equi(keys[8], 2 * oce, Pv),
                       'wr': _equi(keys[9], 2 * oce, Pv),
                       'wout': _equi(keys[10], Pv, Pv)},
        'mbc': {'gp_w': (1.0 / math.sqrt(5.0)) * jax.random.normal(
                    keys[11], (nf, int(GP_PATHS.sum())), jnp.float32),
                'jp_w': (1.0 / math.sqrt(5.0)) * jax.random.normal(
                    keys[12], (nf, int(JOIN_PATHS.sum())), jnp.float32),
                'mv': _equi(keys[13], 2 * nf, nf)},
        # NOTE: module uses init='final' (zeros); nonzero synthetic init for a non-trivial demo.
        'linear_out': _dense(keys[14], c_s, H * concat_out_dim),
        'geometric_out': _equi(keys[15], Pv, H * Pv),
    }


# ----------------------------------------------------------------------------
# Forward pass
# ----------------------------------------------------------------------------
def gfa_forward(params, s, g, z, T, mask, cfg, inf=1e5):
    c_z, C, H = cfg['c_z'], cfg['c_hidden'], cfg['no_heads']
    Pqk, Pv = cfg['no_qk_points'], cfg['no_v_points']
    B, N, _ = s.shape
    Cz = c_z // 4
    Dv = Pv * 16
    lin = lambda p, x: x @ p['w'].T + p['b']
    bf = jnp.bfloat16

    q = lin(params['linear_q'], s).reshape(B, N, H, C)
    kv = lin(params['linear_kv'], s).reshape(B, N, H, 2 * C)
    k, v = kv[..., :C], kv[..., C:]

    T8 = T[..., MOTOR_IDX]                                    # extract_motor

    def make_points(p):
        pts = lin(p, s)                                       # [B,N,H*Pqk*3]
        pts = jnp.stack(jnp.split(pts, 3, axis=-1), axis=-1)  # [B,N,H*Pqk,3]
        pts = apply_point_versor(pts, T8[:, :, None, :])      # [B,N,H*Pqk,4]
        return pts.reshape(B, N, H, Pqk, 4)

    q_pts = make_points(params['linear_q_points'])
    k_pts = make_points(params['linear_k_points'])

    v_g = lin(params['linear_v_g'], s).reshape(B, N, Pv, 16)
    v_g, _ = equi_linear(params['merge_geometric'], jnp.concatenate([v_g, g], axis=-2))
    v_g = v_g.reshape(B, N, H, Pv, 16)
    v_g = equi_layer_norm(v_g)

    bias = lin(params['linear_b'], z)                         # [B,N,N,H]
    pair_z = lin(params['down_z'], z)                         # [B,N,N,Cz]
    square_mask = inf * (mask[..., :, None] * mask[..., None, :] - 1.0)   # [B,N,N]

    v_rel_frames = relative_frame_transformation(T)           # [B,N,N,16]
    vg_vers = apply_versor(v_g, T[:, :, None, None, :])       # [B,N,H,Pv,16]

    hw = jax.nn.softplus(params['head_weights']) * math.sqrt(1.0 / (3.0 * (Pqk * 9.0 / 2.0)))
    pscale = jnp.sqrt(hw)[None, None, :, None, None]
    qp = (q_pts[..., :3] * pscale).reshape(B, N, H, Pqk * 3)
    kp = (k_pts[..., :3] * pscale).reshape(B, N, H, Pqk * 3)
    qsq = jnp.sum(jnp.square(qp), axis=-1)                    # [B,N,H]
    ksq = jnp.sum(jnp.square(kp), axis=-1)                    # [B,N,H]

    # ---- Pallas operand layouts: head-major, keys in the lane dim, bf16 storage ----
    qscale = 1.0 / math.sqrt(3.0 * C)
    qcat = jnp.concatenate([q * qscale, qp], axis=-1).astype(bf).transpose(0, 2, 1, 3)  # [B,H,N,CC]
    kcat = jnp.concatenate([k, kp], axis=-1).astype(bf).transpose(0, 2, 3, 1)           # [B,H,CC,N]
    # merged scalar + geometric value stream (one lane-dense slab)
    vcat = jnp.concatenate([v, vg_vers.reshape(B, N, H, Dv)],
                           axis=-1).astype(bf).transpose(0, 2, 1, 3)                    # [B,H,N,C+Dv]
    # fold sqrt(1/3) bias scale, the square mask AND the -0.5*(|q_pt|^2+|k_pt|^2) terms
    # into one bf16 bias stream; cast BEFORE the transpose (halves the transpose HBM traffic).
    bias_folded = (math.sqrt(1.0 / 3.0) * bias + square_mask[..., None]
                   - 0.5 * qsq[:, :, None, :] - 0.5 * ksq[:, None, :, :]).astype(bf)    # [B,N,N,H]
    bias_t = bias_folded.transpose(0, 3, 1, 2)                                           # [B,H,N,N]
    # merged pair-rep + relative-frame stream, keys in lanes (bf16-first, then transpose)
    pzvr = jnp.concatenate([pair_z.astype(bf).transpose(0, 1, 3, 2),
                            v_rel_frames.astype(bf).transpose(0, 1, 3, 2)], axis=2)      # [B,N,Cz+16,N]

    tq = _pick_query_tile(N)
    out = gfa_attention_pallas(qcat, kcat, vcat, bias_t, pzvr, tq=tq)

    CpD = C + Dv
    CzP = Cz + 16
    main = out[..., :H * CpD].reshape(B, N, H, CpD)
    o = main[..., :C].reshape(B, N, H * C)                    # [B,N,H*C]
    o_pt = main[..., C:].reshape(B, N, H, Pv, 16)
    pair = out[..., H * CpD:].reshape(B, N, H, CzP)
    o_pair = pair[..., :Cz].reshape(B, N, H * Cz)             # [B,N,H*Cz]
    v_rel = pair[..., Cz:]                                    # [B,N,H,16]

    # spec module (ga_inverse_versor) as a Pallas kernel
    o_pt = ga_inverse_versor(o_pt, T[:, :, None, None, :])

    o_pt = pairwise_bilinear(params['bilinear_v'], v_g, o_pt, Pv // 2)
    o_pt = o_pt.reshape(B, N, H * Pv, 16)
    o_pt = gmbc(params['mbc'], o_pt)
    post_norm, post_inf = ga_norm_fn(o_pt)

    v_rel8 = v_rel[..., MOTOR_IDX]                                      # extract_motor
    feats = [o] + [o_pt[..., c] for c in range(16)] \
                + [v_rel8[..., c] for c in range(8)] \
                + [post_norm, post_inf, o_pair]
    s_out = lin(params['linear_out'], jnp.concatenate(feats, axis=-1))
    g_out, _ = equi_linear(params['geometric_out'], o_pt)
    return s_out, g_out, v_rel8


# ----------------------------------------------------------------------------
# Deterministic inputs + driver
# ----------------------------------------------------------------------------
def make_motors(key, shape):
    k1, k2, k3 = jax.random.split(key, 3)
    theta = jax.random.uniform(k1, shape, minval=-1.0, maxval=1.0)
    axis = jax.random.normal(k2, shape + (3,))
    axis = axis / jnp.linalg.norm(axis, axis=-1, keepdims=True)
    trans = 0.5 * jax.random.normal(k3, shape + (3,))
    rotor = jnp.zeros(shape + (16,), jnp.float32)
    rotor = rotor.at[..., 0].set(jnp.cos(theta / 2))
    sth = jnp.sin(theta / 2)
    rotor = rotor.at[..., 8].set(sth * axis[..., 0])
    rotor = rotor.at[..., 9].set(sth * axis[..., 1])
    rotor = rotor.at[..., 10].set(sth * axis[..., 2])
    translator = jnp.zeros(shape + (16,), jnp.float32)
    translator = translator.at[..., 0].set(1.0)
    translator = translator.at[..., 5].set(0.5 * trans[..., 0])
    translator = translator.at[..., 6].set(0.5 * trans[..., 1])
    translator = translator.at[..., 7].set(0.5 * trans[..., 2])
    return geometric_product(translator, rotor)


if __name__ == "__main__":
    cfg = dict(c_s=32, c_z=16, c_hidden=16, no_heads=2, no_qk_points=4, no_v_points=2)
    B, N = 2, 8

    key = jax.random.PRNGKey(0)
    kp_, ks_, kg_, kz_, kt_, kx_ = jax.random.split(key, 6)
    params = init_params(kp_, cfg)
    s = jax.random.normal(ks_, (B, N, cfg['c_s']), jnp.float32)
    g = 0.5 * jax.random.normal(kg_, (B, N, cfg['no_v_points'], 16), jnp.float32)
    z = jax.random.normal(kz_, (B, N, N, cfg['c_z']), jnp.float32)
    T = make_motors(kt_, (B, N))
    mask = jnp.ones((B, N), jnp.float32).at[1, -1].set(0.0)

    # Standalone check of the spec module: Pallas ga_inverse_versor vs plain-JAX reference.
    x_mv = jax.random.normal(kx_, (B, N, 3, 16), jnp.float32)
    ref_inv = apply_inverse_versor(x_mv, T[:, :, None, :])
    got_inv = jax.jit(ga_inverse_versor)(x_mv, T[:, :, None, :])
    jax.block_until_ready(got_inv)
    assert bool(jnp.allclose(got_inv, ref_inv, atol=1e-4, rtol=1e-4))

    fwd = jax.jit(lambda p, s_, g_, z_, T_, m_: gfa_forward(p, s_, g_, z_, T_, m_, cfg))
    s_out, g_out, v_rel = fwd(params, s, g, z, T, mask)
    jax.block_until_ready((s_out, g_out, v_rel))

    assert s_out.shape == (B, N, cfg['c_s'])
    assert g_out.shape == (B, N, cfg['no_v_points'], 16)
    assert v_rel.shape == (B, N, cfg['no_heads'], 8)
    assert not bool(jnp.isnan(s_out).any())
    assert not bool(jnp.isnan(g_out).any())
    print("KERNEL_OK")
</pallas_src>

<mosaic_0001>
module attributes {stable_mosaic.version = 11 : i64} {
  func.func @_inverse_versor_kernel(%arg0: i32, %arg1: memref<16x8x128xf32, #tpu.memory_space<vmem>>, %arg2: memref<16x8x128xf32, #tpu.memory_space<vmem>>, %arg3: memref<16x8x128xf32, #tpu.memory_space<vmem>>) attributes {dimension_semantics = [#tpu.dimension_semantics<parallel>], iteration_bounds = array<i64: 1>, scalar_prefetch = 0 : i64, scratch_operands = 0 : i64, tpu.core_type = #tpu.core_type<tc>, window_params = [{transform_indices = @transform_0, window_bounds = array<i64: 16, 8, 128>}, {transform_indices = @transform_1, window_bounds = array<i64: 16, 8, 128>}, {transform_indices = @transform_2, window_bounds = array<i64: 16, 8, 128>}]} {
    %c0 = arith.constant 0 : index
    %c0_0 = arith.constant 0 : index
    %c0_1 = arith.constant 0 : index
    %0 = vector.load %arg1[%c0, %c0_0, %c0_1] : memref<16x8x128xf32, #tpu.memory_space<vmem>>, vector<1x8x128xf32>
    %1 = vector.shape_cast %0 : vector<1x8x128xf32> to vector<8x128xf32>
    %c1 = arith.constant 1 : index
    %c0_2 = arith.constant 0 : index
    %c0_3 = arith.constant 0 : index
    %2 = vector.load %arg1[%c1, %c0_2, %c0_3] : memref<16x8x128xf32, #tpu.memory_space<vmem>>, vector<1x8x128xf32>
    %3 = vector.shape_cast %2 : vector<1x8x128xf32> to vector<8x128xf32>
    %c2 = arith.constant 2 : index
    %c0_4 = arith.constant 0 : index
    %c0_5 = arith.constant 0 : index
    %4 = vector.load %arg1[%c2, %c0_4, %c0_5] : memref<16x8x128xf32, #tpu.memory_space<vmem>>, vector<1x8x128xf32>
    %5 = vector.shape_cast %4 : vector<1x8x128xf32> to vector<8x128xf32>
    %c3 = arith.constant 3 : index
    %c0_6 = arith.constant 0 : index
    %c0_7 = arith.constant 0 : index
    %6 = vector.load %arg1[%c3, %c0_6, %c0_7] : memref<16x8x128xf32, #tpu.memory_space<vmem>>, vector<1x8x128xf32>
    %7 = vector.shape_cast %6 : vector<1x8x128xf32> to vector<8x128xf32>
    %c4 = arith.constant 4 : index
    %c0_8 = arith.constant 0 : index
    %c0_9 = arith.constant 0 : index
    %8 = vector.load %arg1[%c4, %c0_8, %c0_9] : memref<16x8x128xf32, #tpu.memory_space<vmem>>, vector<1x8x128xf32>
    %9 = vector.shape_cast %8 : vector<1x8x128xf32> to vector<8x128xf32>
    %c5 = arith.constant 5 : index
    %c0_10 = arith.constant 0 : index
    %c0_11 = arith.constant 0 : index
    %10 = vector.load %arg1[%c5, %c0_10, %c0_11] : memref<16x8x128xf32, #tpu.memory_space<vmem>>, vector<1x8x128xf32>
    %11 = vector.shape_cast %10 : vector<1x8x128xf32> to vector<8x128xf32>
    %c6 = arith.constant 6 : index
    %c0_12 = arith.constant 0 : index
    %c0_13 = arith.constant 0 : index
    %12 = vector.load %arg1[%c6, %c0_12, %c0_13] : memref<16x8x128xf32, #tpu.memory_space<vmem>>, vector<1x8x128xf32>
    %13 = vector.shape_cast %12 : vector<1x8x128xf32> to vector<8x128xf32>
    %c7 = arith.constant 7 : index
    %c0_14 = arith.constant 0 : index
    %c0_15 = arith.constant 0 : index
    %14 = vector.load %arg1[%c7, %c0_14, %c0_15] : memref<16x8x128xf32, #tpu.memory_space<vmem>>, vector<1x8x128xf32>
    %15 = vector.shape_cast %14 : vector<1x8x128xf32> to vector<8x128xf32>
    %c8 = arith.constant 8 : index
    %c0_16 = arith.constant 0 : index
    %c0_17 = arith.constant 0 : index
    %16 = vector.load %arg1[%c8, %c0_16, %c0_17] : memref<16x8x128xf32, #tpu.memory_space<vmem>>, vector<1x8x128xf32>
    %17 = vector.shape_cast %16 : vector<1x8x128xf32> to vector<8x128xf32>
    %c9 = arith.constant 9 : index
    %c0_18 = arith.constant 0 : index
    %c0_19 = arith.constant 0 : index
    %18 = vector.load %arg1[%c9, %c0_18, %c0_19] : memref<16x8x128xf32, #tpu.memory_space<vmem>>, vector<1x8x128xf32>
    %19 = vector.shape_cast %18 : vector<1x8x128xf32> to vector<8x128xf32>
    %c10 = arith.constant 10 : index
    %c0_20 = arith.constant 0 : index
    %c0_21 = arith.constant 0 : index
    %20 = vector.load %arg1[%c10, %c0_20, %c0_21] : memref<16x8x128xf32, #tpu.memory_space<vmem>>, vector<1x8x128xf32>
    %21 = vector.shape_cast %20 : vector<1x8x128xf32> to vector<8x128xf32>
    %c11 = arith.constant 11 : index
    %c0_22 = arith.constant 0 : index
    %c0_23 = arith.constant 0 : index
    %22 = vector.load %arg1[%c11, %c0_22, %c0_23] : memref<16x8x128xf32, #tpu.memory_space<vmem>>, vector<1x8x128xf32>
    %23 = vector.shape_cast %22 : vector<1x8x128xf32> to vector<8x128xf32>
    %c12 = arith.constant 12 : index
    %c0_24 = arith.constant 0 : index
    %c0_25 = arith.constant 0 : index
    %24 = vector.load %arg1[%c12, %c0_24, %c0_25] : memref<16x8x128xf32, #tpu.memory_space<vmem>>, vector<1x8x128xf32>
    %25 = vector.shape_cast %24 : vector<1x8x128xf32> to vector<8x128xf32>
    %c13 = arith.constant 13 : index
    %c0_26 = arith.constant 0 : index
    %c0_27 = arith.constant 0 : index
    %26 = vector.load %arg1[%c13, %c0_26, %c0_27] : memref<16x8x128xf32, #tpu.memory_space<vmem>>, vector<1x8x128xf32>
    %27 = vector.shape_cast %26 : vector<1x8x128xf32> to vector<8x128xf32>
    %c14 = arith.constant 14 : index
    %c0_28 = arith.constant 0 : index
    %c0_29 = arith.constant 0 : index
    %28 = vector.load %arg1[%c14, %c0_28, %c0_29] : memref<16x8x128xf32, #tpu.memory_space<vmem>>, vector<1x8x128xf32>
    %29 = vector.shape_cast %28 : vector<1x8x128xf32> to vector<8x128xf32>
    %c15 = arith.constant 15 : index
    %c0_30 = arith.constant 0 : index
    %c0_31 = arith.constant 0 : index
    %30 = vector.load %arg1[%c15, %c0_30, %c0_31] : memref<16x8x128xf32, #tpu.memory_space<vmem>>, vector<1x8x128xf32>
    %31 = vector.shape_cast %30 : vector<1x8x128xf32> to vector<8x128xf32>
    %c0_32 = arith.constant 0 : index
    %c0_33 = arith.constant 0 : index
    %c0_34 = arith.constant 0 : index
    %32 = vector.load %arg2[%c0_32, %c0_33, %c0_34] : memref<16x8x128xf32, #tpu.memory_space<vmem>>, vector<1x8x128xf32>
    %33 = vector.shape_cast %32 : vector<1x8x128xf32> to vector<8x128xf32>
    %c1_35 = arith.constant 1 : index
    %c0_36 = arith.constant 0 : index
    %c0_37 = arith.constant 0 : index
    %34 = vector.load %arg2[%c1_35, %c0_36, %c0_37] : memref<16x8x128xf32, #tpu.memory_space<vmem>>, vector<1x8x128xf32>
    %35 = vector.shape_cast %34 : vector<1x8x128xf32> to vector<8x128xf32>
    %c2_38 = arith.constant 2 : index
    %c0_39 = arith.constant 0 : index
    %c0_40 = arith.constant 0 : index
    %36 = vector.load %arg2[%c2_38, %c0_39, %c0_40] : memref<16x8x128xf32, #tpu.memory_space<vmem>>, vector<1x8x128xf32>
    %37 = vector.shape_cast %36 : vector<1x8x128xf32> to vector<8x128xf32>
    %c3_41 = arith.constant 3 : index
    %c0_42 = arith.constant 0 : index
    %c0_43 = arith.constant 0 : index
    %38 = vector.load %arg2[%c3_41, %c0_42, %c0_43] : memref<16x8x128xf32, #tpu.memory_space<vmem>>, vector<1x8x128xf32>
    %39 = vector.shape_cast %38 : vector<1x8x128xf32> to vector<8x128xf32>
    %c4_44 = arith.constant 4 : index
    %c0_45 = arith.constant 0 : index
    %c0_46 = arith.constant 0 : index
    %40 = vector.load %arg2[%c4_44, %c0_45, %c0_46] : memref<16x8x128xf32, #tpu.memory_space<vmem>>, vector<1x8x128xf32>
    %41 = vector.shape_cast %40 : vector<1x8x128xf32> to vector<8x128xf32>
    %c5_47 = arith.constant 5 : index
    %c0_48 = arith.constant 0 : index
    %c0_49 = arith.constant 0 : index
    %42 = vector.load %arg2[%c5_47, %c0_48, %c0_49] : memref<16x8x128xf32, #tpu.memory_space<vmem>>, vector<1x8x128xf32>
    %43 = vector.shape_cast %42 : vector<1x8x128xf32> to vector<8x128xf32>
    %c6_50 = arith.constant 6 : index
    %c0_51 = arith.constant 0 : index
    %c0_52 = arith.constant 0 : index
    %44 = vector.load %arg2[%c6_50, %c0_51, %c0_52] : memref<16x8x128xf32, #tpu.memory_space<vmem>>, vector<1x8x128xf32>
    %45 = vector.shape_cast %44 : vector<1x8x128xf32> to vector<8x128xf32>
    %c7_53 = arith.constant 7 : index
    %c0_54 = arith.constant 0 : index
    %c0_55 = arith.constant 0 : index
    %46 = vector.load %arg2[%c7_53, %c0_54, %c0_55] : memref<16x8x128xf32, #tpu.memory_space<vmem>>, vector<1x8x128xf32>
    %47 = vector.shape_cast %46 : vector<1x8x128xf32> to vector<8x128xf32>
    %c8_56 = arith.constant 8 : index
    %c0_57 = arith.constant 0 : index
    %c0_58 = arith.constant 0 : index
    %48 = vector.load %arg2[%c8_56, %c0_57, %c0_58] : memref<16x8x128xf32, #tpu.memory_space<vmem>>, vector<1x8x128xf32>
    %49 = vector.shape_cast %48 : vector<1x8x128xf32> to vector<8x128xf32>
    %c9_59 = arith.constant 9 : index
    %c0_60 = arith.constant 0 : index
    %c0_61 = arith.constant 0 : index
    %50 = vector.load %arg2[%c9_59, %c0_60, %c0_61] : memref<16x8x128xf32, #tpu.memory_space<vmem>>, vector<1x8x128xf32>
    %51 = vector.shape_cast %50 : vector<1x8x128xf32> to vector<8x128xf32>
    %c10_62 = arith.constant 10 : index
    %c0_63 = arith.constant 0 : index
    %c0_64 = arith.constant 0 : index
    %52 = vector.load %arg2[%c10_62, %c0_63, %c0_64] : memref<16x8x128xf32, #tpu.memory_space<vmem>>, vector<1x8x128xf32>
    %53 = vector.shape_cast %52 : vector<1x8x128xf32> to vector<8x128xf32>
    %c11_65 = arith.constant 11 : index
    %c0_66 = arith.constant 0 : index
    %c0_67 = arith.constant 0 : index
    %54 = vector.load %arg2[%c11_65, %c0_66, %c0_67] : memref<16x8x128xf32, #tpu.memory_space<vmem>>, vector<1x8x128xf32>
    %55 = vector.shape_cast %54 : vector<1x8x128xf32> to vector<8x128xf32>
    %c12_68 = arith.constant 12 : index
    %c0_69 = arith.constant 0 : index
    %c0_70 = arith.constant 0 : index
    %56 = vector.load %arg2[%c12_68, %c0_69, %c0_70] : memref<16x8x128xf32, #tpu.memory_space<vmem>>, vector<1x8x128xf32>
    %57 = vector.shape_cast %56 : vector<1x8x128xf32> to vector<8x128xf32>
    %c13_71 = arith.constant 13 : index
    %c0_72 = arith.constant 0 : index
    %c0_73 = arith.constant 0 : index
    %58 = vector.load %arg2[%c13_71, %c0_72, %c0_73] : memref<16x8x128xf32, #tpu.memory_space<vmem>>, vector<1x8x128xf32>
    %59 = vector.shape_cast %58 : vector<1x8x128xf32> to vector<8x128xf32>
    %c14_74 = arith.constant 14 : index
    %c0_75 = arith.constant 0 : index
    %c0_76 = arith.constant 0 : index
    %60 = vector.load %arg2[%c14_74, %c0_75, %c0_76] : memref<16x8x128xf32, #tpu.memory_space<vmem>>, vector<1x8x128xf32>
    %61 = vector.shape_cast %60 : vector<1x8x128xf32> to vector<8x128xf32>
    %c15_77 = arith.constant 15 : index
    %c0_78 = arith.constant 0 : index
    %c0_79 = arith.constant 0 : index
    %62 = vector.load %arg2[%c15_77, %c0_78, %c0_79] : memref<16x8x128xf32, #tpu.memory_space<vmem>>, vector<1x8x128xf32>
    %63 = vector.shape_cast %62 : vector<1x8x128xf32> to vector<8x128xf32>
    %cst = arith.constant 0.000000e+00 : f32
    %64 = vector.broadcast %cst : f32 to vector<8x128xf32>
    %65 = arith.mulf %33, %1 : vector<8x128xf32>
    %66 = arith.addf %64, %65 : vector<8x128xf32>
    %67 = arith.mulf %37, %5 : vector<8x128xf32>
    %68 = arith.addf %66, %67 : vector<8x128xf32>
    %69 = arith.mulf %39, %7 : vector<8x128xf32>
    %70 = arith.addf %68, %69 : vector<8x128xf32>
    %71 = arith.mulf %41, %9 : vector<8x128xf32>
    %72 = arith.addf %70, %71 : vector<8x128xf32>
    %73 = arith.mulf %49, %17 : vector<8x128xf32>
    %74 = arith.addf %72, %73 : vector<8x128xf32>
    %75 = arith.mulf %51, %19 : vector<8x128xf32>
    %76 = arith.addf %74, %75 : vector<8x128xf32>
    %77 = arith.mulf %53, %21 : vector<8x128xf32>
    %78 = arith.addf %76, %77 : vector<8x128xf32>
    %79 = arith.mulf %61, %29 : vector<8x128xf32>
    %80 = arith.addf %78, %79 : vector<8x128xf32>
    %cst_80 = arith.constant 0.000000e+00 : f32
    %81 = vector.broadcast %cst_80 : f32 to vector<8x128xf32>
    %82 = arith.mulf %33, %3 : vector<8x128xf32>
    %83 = arith.addf %81, %82 : vector<8x128xf32>
    %84 = arith.mulf %35, %1 : vector<8x128xf32>
    %85 = arith.addf %83, %84 : vector<8x128xf32>
    %86 = arith.mulf %37, %11 : vector<8x128xf32>
    %87 = arith.subf %85, %86 : vector<8x128xf32>
    %88 = arith.mulf %39, %13 : vector<8x128xf32>
    %89 = arith.subf %87, %88 : vector<8x128xf32>
    %90 = arith.mulf %41, %15 : vector<8x128xf32>
    %91 = arith.subf %89, %90 : vector<8x128xf32>
    %92 = arith.mulf %43, %5 : vector<8x128xf32>
    %93 = arith.subf %91, %92 : vector<8x128xf32>
    %94 = arith.mulf %45, %7 : vector<8x128xf32>
    %95 = arith.subf %93, %94 : vector<8x128xf32>
    %96 = arith.mulf %47, %9 : vector<8x128xf32>
    %97 = arith.subf %95, %96 : vector<8x128xf32>
    %98 = arith.mulf %49, %23 : vector<8x128xf32>
    %99 = arith.addf %97, %98 : vector<8x128xf32>
    %100 = arith.mulf %51, %25 : vector<8x128xf32>
    %101 = arith.addf %99, %100 : vector<8x128xf32>
    %102 = arith.mulf %53, %27 : vector<8x128xf32>
    %103 = arith.addf %101, %102 : vector<8x128xf32>
    %104 = arith.mulf %55, %17 : vector<8x128xf32>
    %105 = arith.addf %103, %104 : vector<8x128xf32>
    %106 = arith.mulf %57, %19 : vector<8x128xf32>
    %107 = arith.addf %105, %106 : vector<8x128xf32>
    %108 = arith.mulf %59, %21 : vector<8x128xf32>
    %109 = arith.addf %107, %108 : vector<8x128xf32>
    %110 = arith.mulf %61, %31 : vector<8x128xf32>
    %111 = arith.subf %109, %110 : vector<8x128xf32>
    %112 = arith.mulf %63, %29 : vector<8x128xf32>
    %113 = arith.subf %111, %112 : vector<8x128xf32>
    %cst_81 = arith.constant 0.000000e+00 : f32
    %114 = vector.broadcast %cst_81 : f32 to vector<8x128xf32>
    %115 = arith.mulf %33, %5 : vector<8x128xf32>
    %116 = arith.addf %114, %115 : vector<8x128xf32>
    %117 = arith.mulf %37, %1 : vector<8x128xf32>
    %118 = arith.addf %116, %117 : vector<8x128xf32>
    %119 = arith.mulf %39, %17 : vector<8x128xf32>
    %120 = arith.subf %118, %119 : vector<8x128xf32>
    %121 = arith.mulf %41, %19 : vector<8x128xf32>
    %122 = arith.subf %120, %121 : vector<8x128xf32>
    %123 = arith.mulf %49, %7 : vector<8x128xf32>
    %124 = arith.subf %122, %123 : vector<8x128xf32>
    %125 = arith.mulf %51, %9 : vector<8x128xf32>
    %126 = arith.subf %124, %125 : vector<8x128xf32>
    %127 = arith.mulf %53, %29 : vector<8x128xf32>
    %128 = arith.addf %126, %127 : vector<8x128xf32>
    %129 = arith.mulf %61, %21 : vector<8x128xf32>
    %130 = arith.addf %128, %129 : vector<8x128xf32>
    %cst_82 = arith.constant 0.000000e+00 : f32
    %131 = vector.broadcast %cst_82 : f32 to vector<8x128xf32>
    %132 = arith.mulf %33, %7 : vector<8x128xf32>
    %133 = arith.addf %131, %132 : vector<8x128xf32>
    %134 = arith.mulf %37, %17 : vector<8x128xf32>
    %135 = arith.addf %133, %134 : vector<8x128xf32>
    %136 = arith.mulf %39, %1 : vector<8x128xf32>
    %137 = arith.addf %135, %136 : vector<8x128xf32>
    %138 = arith.mulf %41, %21 : vector<8x128xf32>
    %139 = arith.subf %137, %138 : vector<8x128xf32>
    %140 = arith.mulf %49, %5 : vector<8x128xf32>
    %141 = arith.addf %139, %140 : vector<8x128xf32>
    %142 = arith.mulf %51, %29 : vector<8x128xf32>
    %143 = arith.subf %141, %142 : vector<8x128xf32>
    %144 = arith.mulf %53, %9 : vector<8x128xf32>
    %145 = arith.subf %143, %144 : vector<8x128xf32>
    %146 = arith.mulf %61, %19 : vector<8x128xf32>
    %147 = arith.subf %145, %146 : vector<8x128xf32>
    %cst_83 = arith.constant 0.000000e+00 : f32
    %148 = vector.broadcast %cst_83 : f32 to vector<8x128xf32>
    %149 = arith.mulf %33, %9 : vector<8x128xf32>
    %150 = arith.addf %148, %149 : vector<8x128xf32>
    %151 = arith.mulf %37, %19 : vector<8x128xf32>
    %152 = arith.addf %150, %151 : vector<8x128xf32>
    %153 = arith.mulf %39, %21 : vector<8x128xf32>
    %154 = arith.addf %152, %153 : vector<8x128xf32>
    %155 = arith.mulf %41, %1 : vector<8x128xf32>
    %156 = arith.addf %154, %155 : vector<8x128xf32>
    %157 = arith.mulf %49, %29 : vector<8x128xf32>
    %158 = arith.addf %156, %157 : vector<8x128xf32>
    %159 = arith.mulf %51, %5 : vector<8x128xf32>
    %160 = arith.addf %158, %159 : vector<8x128xf32>
    %161 = arith.mulf %53, %7 : vector<8x128xf32>
    %162 = arith.addf %160, %161 : vector<8x128xf32>
    %163 = arith.mulf %61, %17 : vector<8x128xf32>
    %164 = arith.addf %162, %163 : vector<8x128xf32>
    %cst_84 = arith.constant 0.000000e+00 : f32
    %165 = vector.broadcast %cst_84 : f32 to vector<8x128xf32>
    %166 = arith.mulf %33, %11 : vector<8x128xf32>
    %167 = arith.addf %165, %166 : vector<8x128xf32>
    %168 = arith.mulf %35, %5 : vector<8x128xf32>
    %169 = arith.addf %167, %168 : vector<8x128xf32>
    %170 = arith.mulf %37, %3 : vector<8x128xf32>
    %171 = arith.subf %169, %170 : vector<8x128xf32>
    %172 = arith.mulf %39, %23 : vector<8x128xf32>
    %173 = arith.addf %171, %172 : vector<8x128xf32>
    %174 = arith.mulf %41, %25 : vector<8x128xf32>
    %175 = arith.addf %173, %174 : vector<8x128xf32>
    %176 = arith.mulf %43, %1 : vector<8x128xf32>
    %177 = arith.subf %175, %176 : vector<8x128xf32>
    %178 = arith.mulf %45, %17 : vector<8x128xf32>
    %179 = arith.addf %177, %178 : vector<8x128xf32>
    %180 = arith.mulf %47, %19 : vector<8x128xf32>
    %181 = arith.addf %179, %180 : vector<8x128xf32>
    %182 = arith.mulf %49, %13 : vector<8x128xf32>
    %183 = arith.subf %181, %182 : vector<8x128xf32>
    %184 = arith.mulf %51, %15 : vector<8x128xf32>
    %185 = arith.subf %183, %184 : vector<8x128xf32>
    %186 = arith.mulf %53, %31 : vector<8x128xf32>
    %187 = arith.addf %185, %186 : vector<8x128xf32>
    %188 = arith.mulf %55, %7 : vector<8x128xf32>
    %189 = arith.subf %187, %188 : vector<8x128xf32>
    %190 = arith.mulf %57, %9 : vector<8x128xf32>
    %191 = arith.subf %189, %190 : vector<8x128xf32>
    %192 = arith.mulf %59, %29 : vector<8x128xf32>
    %193 = arith.addf %191, %192 : vector<8x128xf32>
    %194 = arith.mulf %61, %27 : vector<8x128xf32>
    %195 = arith.subf %193, %194 : vector<8x128xf32>
    %196 = arith.mulf %63, %21 : vector<8x128xf32>
    %197 = arith.subf %195, %196 : vector<8x128xf32>
    %cst_85 = arith.constant 0.000000e+00 : f32
    %198 = vector.broadcast %cst_85 : f32 to vector<8x128xf32>
    %199 = arith.mulf %33, %13 : vector<8x128xf32>
    %200 = arith.addf %198, %199 : vector<8x128xf32>
    %201 = arith.mulf %35, %7 : vector<8x128xf32>
    %202 = arith.addf %200, %201 : vector<8x128xf32>
    %203 = arith.mulf %37, %23 : vector<8x128xf32>
    %204 = arith.subf %202, %203 : vector<8x128xf32>
    %205 = arith.mulf %39, %3 : vector<8x128xf32>
    %206 = arith.subf %204, %205 : vector<8x128xf32>
    %207 = arith.mulf %41, %27 : vector<8x128xf32>
    %208 = arith.addf %206, %207 : vector<8x128xf32>
    %209 = arith.mulf %43, %17 : vector<8x128xf32>
    %210 = arith.subf %208, %209 : vector<8x128xf32>
    %211 = arith.mulf %45, %1 : vector<8x128xf32>
    %212 = arith.subf %210, %211 : vector<8x128xf32>
    %213 = arith.mulf %47, %21 : vector<8x128xf32>
    %214 = arith.addf %212, %213 : vector<8x128xf32>
    %215 = arith.mulf %49, %11 : vector<8x128xf32>
    %216 = arith.addf %214, %215 : vector<8x128xf32>
    %217 = arith.mulf %51, %31 : vector<8x128xf32>
    %218 = arith.subf %216, %217 : vector<8x128xf32>
    %219 = arith.mulf %53, %15 : vector<8x128xf32>
    %220 = arith.subf %218, %219 : vector<8x128xf32>
    %221 = arith.mulf %55, %5 : vector<8x128xf32>
    %222 = arith.addf %220, %221 : vector<8x128xf32>
    %223 = arith.mulf %57, %29 : vector<8x128xf32>
    %224 = arith.subf %222, %223 : vector<8x128xf32>
    %225 = arith.mulf %59, %9 : vector<8x128xf32>
    %226 = arith.subf %224, %225 : vector<8x128xf32>
    %227 = arith.mulf %61, %25 : vector<8x128xf32>
    %228 = arith.addf %226, %227 : vector<8x128xf32>
    %229 = arith.mulf %63, %19 : vector<8x128xf32>
    %230 = arith.addf %228, %229 : vector<8x128xf32>
    %cst_86 = arith.constant 0.000000e+00 : f32
    %231 = vector.broadcast %cst_86 : f32 to vector<8x128xf32>
    %232 = arith.mulf %33, %15 : vector<8x128xf32>
    %233 = arith.addf %231, %232 : vector<8x128xf32>
    %234 = arith.mulf %35, %9 : vector<8x128xf32>
    %235 = arith.addf %233, %234 : vector<8x128xf32>
    %236 = arith.mulf %37, %25 : vector<8x128xf32>
    %237 = arith.subf %235, %236 : vector<8x128xf32>
    %238 = arith.mulf %39, %27 : vector<8x128xf32>
    %239 = arith.subf %237, %238 : vector<8x128xf32>
    %240 = arith.mulf %41, %3 : vector<8x128xf32>
    %241 = arith.subf %239, %240 : vector<8x128xf32>
    %242 = arith.mulf %43, %19 : vector<8x128xf32>
    %243 = arith.subf %241, %242 : vector<8x128xf32>
    %244 = arith.mulf %45, %21 : vector<8x128xf32>
    %245 = arith.subf %243, %244 : vector<8x128xf32>
    %246 = arith.mulf %47, %1 : vector<8x128xf32>
    %247 = arith.subf %245, %246 : vector<8x128xf32>
    %248 = arith.mulf %49, %31 : vector<8x128xf32>
    %249 = arith.addf %247, %248 : vector<8x128xf32>
    %250 = arith.mulf %51, %11 : vector<8x128xf32>
    %251 = arith.addf %249, %250 : vector<8x128xf32>
    %252 = arith.mulf %53, %13 : vector<8x128xf32>
    %253 = arith.addf %251, %252 : vector<8x128xf32>
    %254 = arith.mulf %55, %29 : vector<8x128xf32>
    %255 = arith.addf %253, %254 : vector<8x128xf32>
    %256 = arith.mulf %57, %5 : vector<8x128xf32>
    %257 = arith.addf %255, %256 : vector<8x128xf32>
    %258 = arith.mulf %59, %7 : vector<8x128xf32>
    %259 = arith.addf %257, %258 : vector<8x128xf32>
    %260 = arith.mulf %61, %23 : vector<8x128xf32>
    %261 = arith.subf %259, %260 : vector<8x128xf32>
    %262 = arith.mulf %63, %17 : vector<8x128xf32>
    %263 = arith.subf %261, %262 : vector<8x128xf32>
    %cst_87 = arith.constant 0.000000e+00 : f32
    %264 = vector.broadcast %cst_87 : f32 to vector<8x128xf32>
    %265 = arith.mulf %33, %17 : vector<8x128xf32>
    %266 = arith.addf %264, %265 : vector<8x128xf32>
    %267 = arith.mulf %37, %7 : vector<8x128xf32>
    %268 = arith.addf %266, %267 : vector<8x128xf32>
    %269 = arith.mulf %39, %5 : vector<8x128xf32>
    %270 = arith.subf %268, %269 : vector<8x128xf32>
    %271 = arith.mulf %41, %29 : vector<8x128xf32>
    %272 = arith.addf %270, %271 : vector<8x128xf32>
    %273 = arith.mulf %49, %1 : vector<8x128xf32>
    %274 = arith.subf %272, %273 : vector<8x128xf32>
    %275 = arith.mulf %51, %21 : vector<8x128xf32>
    %276 = arith.addf %274, %275 : vector<8x128xf32>
    %277 = arith.mulf %53, %19 : vector<8x128xf32>
    %278 = arith.subf %276, %277 : vector<8x128xf32>
    %279 = arith.mulf %61, %9 : vector<8x128xf32>
    %280 = arith.subf %278, %279 : vector<8x128xf32>
    %cst_88 = arith.constant 0.000000e+00 : f32
    %281 = vector.broadcast %cst_88 : f32 to vector<8x128xf32>
    %282 = arith.mulf %33, %19 : vector<8x128xf32>
    %283 = arith.addf %281, %282 : vector<8x128xf32>
    %284 = arith.mulf %37, %9 : vector<8x128xf32>
    %285 = arith.addf %283, %284 : vector<8x128xf32>
    %286 = arith.mulf %39, %29 : vector<8x128xf32>
    %287 = arith.subf %285, %286 : vector<8x128xf32>
    %288 = arith.mulf %41, %5 : vector<8x128xf32>
    %289 = arith.subf %287, %288 : vector<8x128xf32>
    %290 = arith.mulf %49, %21 : vector<8x128xf32>
    %291 = arith.subf %289, %290 : vector<8x128xf32>
    %292 = arith.mulf %51, %1 : vector<8x128xf32>
    %293 = arith.subf %291, %292 : vector<8x128xf32>
    %294 = arith.mulf %53, %17 : vector<8x128xf32>
    %295 = arith.addf %293, %294 : vector<8x128xf32>
    %296 = arith.mulf %61, %7 : vector<8x128xf32>
    %297 = arith.addf %295, %296 : vector<8x128xf32>
    %cst_89 = arith.constant 0.000000e+00 : f32
    %298 = vector.broadcast %cst_89 : f32 to vector<8x128xf32>
    %299 = arith.mulf %33, %21 : vector<8x128xf32>
    %300 = arith.addf %298, %299 : vector<8x128xf32>
    %301 = arith.mulf %37, %29 : vector<8x128xf32>
    %302 = arith.addf %300, %301 : vector<8x128xf32>
    %303 = arith.mulf %39, %9 : vector<8x128xf32>
    %304 = arith.addf %302, %303 : vector<8x128xf32>
    %305 = arith.mulf %41, %7 : vector<8x128xf32>
    %306 = arith.subf %304, %305 : vector<8x128xf32>
    %307 = arith.mulf %49, %19 : vector<8x128xf32>
    %308 = arith.addf %306, %307 : vector<8x128xf32>
    %309 = arith.mulf %51, %17 : vector<8x128xf32>
    %310 = arith.subf %308, %309 : vector<8x128xf32>
    %311 = arith.mulf %53, %1 : vector<8x128xf32>
    %312 = arith.subf %310, %311 : vector<8x128xf32>
    %313 = arith.mulf %61, %5 : vector<8x128xf32>
    %314 = arith.subf %312, %313 : vector<8x128xf32>
    %cst_90 = arith.constant 0.000000e+00 : f32
    %315 = vector.broadcast %cst_90 : f32 to vector<8x128xf32>
    %316 = arith.mulf %33, %23 : vector<8x128xf32>
    %317 = arith.addf %315, %316 : vector<8x128xf32>
    %318 = arith.mulf %35, %17 : vector<8x128xf32>
    %319 = arith.addf %317, %318 : vector<8x128xf32>
    %320 = arith.mulf %37, %13 : vector<8x128xf32>
    %321 = arith.subf %319, %320 : vector<8x128xf32>
    %322 = arith.mulf %39, %11 : vector<8x128xf32>
    %323 = arith.addf %321, %322 : vector<8x128xf32>
    %324 = arith.mulf %41, %31 : vector<8x128xf32>
    %325 = arith.subf %323, %324 : vector<8x128xf32>
    %326 = arith.mulf %43, %7 : vector<8x128xf32>
    %327 = arith.subf %325, %326 : vector<8x128xf32>
    %328 = arith.mulf %45, %5 : vector<8x128xf32>
    %329 = arith.addf %327, %328 : vector<8x128xf32>
    %330 = arith.mulf %47, %29 : vector<8x128xf32>
    %331 = arith.subf %329, %330 : vector<8x128xf32>
    %332 = arith.mulf %49, %3 : vector<8x128xf32>
    %333 = arith.subf %331, %332 : vector<8x128xf32>
    %334 = arith.mulf %51, %27 : vector<8x128xf32>
    %335 = arith.addf %333, %334 : vector<8x128xf32>
    %336 = arith.mulf %53, %25 : vector<8x128xf32>
    %337 = arith.subf %335, %336 : vector<8x128xf32>
    %338 = arith.mulf %55, %1 : vector<8x128xf32>
    %339 = arith.subf %337, %338 : vector<8x128xf32>
    %340 = arith.mulf %57, %21 : vector<8x128xf32>
    %341 = arith.addf %339, %340 : vector<8x128xf32>
    %342 = arith.mulf %59, %19 : vector<8x128xf32>
    %343 = arith.subf %341, %342 : vector<8x128xf32>
    %344 = arith.mulf %61, %15 : vector<8x128xf32>
    %345 = arith.addf %343, %344 : vector<8x128xf32>
    %346 = arith.mulf %63, %9 : vector<8x128xf32>
    %347 = arith.addf %345, %346 : vector<8x128xf32>
    %cst_91 = arith.constant 0.000000e+00 : f32
    %348 = vector.broadcast %cst_91 : f32 to vector<8x128xf32>
    %349 = arith.mulf %33, %25 : vector<8x128xf32>
    %350 = arith.addf %348, %349 : vector<8x128xf32>
    %351 = arith.mulf %35, %19 : vector<8x128xf32>
    %352 = arith.addf %350, %351 : vector<8x128xf32>
    %353 = arith.mulf %37, %15 : vector<8x128xf32>
    %354 = arith.subf %352, %353 : vector<8x128xf32>
    %355 = arith.mulf %39, %31 : vector<8x128xf32>
    %356 = arith.addf %354, %355 : vector<8x128xf32>
    %357 = arith.mulf %41, %11 : vector<8x128xf32>
    %358 = arith.addf %356, %357 : vector<8x128xf32>
    %359 = arith.mulf %43, %9 : vector<8x128xf32>
    %360 = arith.subf %358, %359 : vector<8x128xf32>
    %361 = arith.mulf %45, %29 : vector<8x128xf32>
    %362 = arith.addf %360, %361 : vector<8x128xf32>
    %363 = arith.mulf %47, %5 : vector<8x128xf32>
    %364 = arith.addf %362, %363 : vector<8x128xf32>
    %365 = arith.mulf %49, %27 : vector<8x128xf32>
    %366 = arith.subf %364, %365 : vector<8x128xf32>
    %367 = arith.mulf %51, %3 : vector<8x128xf32>
    %368 = arith.subf %366, %367 : vector<8x128xf32>
    %369 = arith.mulf %53, %23 : vector<8x128xf32>
    %370 = arith.addf %368, %369 : vector<8x128xf32>
    %371 = arith.mulf %55, %21 : vector<8x128xf32>
    %372 = arith.subf %370, %371 : vector<8x128xf32>
    %373 = arith.mulf %57, %1 : vector<8x128xf32>
    %374 = arith.subf %372, %373 : vector<8x128xf32>
    %375 = arith.mulf %59, %17 : vector<8x128xf32>
    %376 = arith.addf %374, %375 : vector<8x128xf32>
    %377 = arith.mulf %61, %13 : vector<8x128xf32>
    %378 = arith.subf %376, %377 : vector<8x128xf32>
    %379 = arith.mulf %63, %7 : vector<8x128xf32>
    %380 = arith.subf %378, %379 : vector<8x128xf32>
    %cst_92 = arith.constant 0.000000e+00 : f32
    %381 = vector.broadcast %cst_92 : f32 to vector<8x128xf32>
    %382 = arith.mulf %33, %27 : vector<8x128xf32>
    %383 = arith.addf %381, %382 : vector<8x128xf32>
    %384 = arith.mulf %35, %21 : vector<8x128xf32>
    %385 = arith.addf %383, %384 : vector<8x128xf32>
    %386 = arith.mulf %37, %31 : vector<8x128xf32>
    %387 = arith.subf %385, %386 : vector<8x128xf32>
    %388 = arith.mulf %39, %15 : vector<8x128xf32>
    %389 = arith.subf %387, %388 : vector<8x128xf32>
    %390 = arith.mulf %41, %13 : vector<8x128xf32>
    %391 = arith.addf %389, %390 : vector<8x128xf32>
    %392 = arith.mulf %43, %29 : vector<8x128xf32>
    %393 = arith.subf %391, %392 : vector<8x128xf32>
    %394 = arith.mulf %45, %9 : vector<8x128xf32>
    %395 = arith.subf %393, %394 : vector<8x128xf32>
    %396 = arith.mulf %47, %7 : vector<8x128xf32>
    %397 = arith.addf %395, %396 : vector<8x128xf32>
    %398 = arith.mulf %49, %25 : vector<8x128xf32>
    %399 = arith.addf %397, %398 : vector<8x128xf32>
    %400 = arith.mulf %51, %23 : vector<8x128xf32>
    %401 = arith.subf %399, %400 : vector<8x128xf32>
    %402 = arith.mulf %53, %3 : vector<8x128xf32>
    %403 = arith.subf %401, %402 : vector<8x128xf32>
    %404 = arith.mulf %55, %19 : vector<8x128xf32>
    %405 = arith.addf %403, %404 : vector<8x128xf32>
    %406 = arith.mulf %57, %17 : vector<8x128xf32>
    %407 = arith.subf %405, %406 : vector<8x128xf32>
    %408 = arith.mulf %59, %1 : vector<8x128xf32>
    %409 = arith.subf %407, %408 : vector<8x128xf32>
    %410 = arith.mulf %61, %11 : vector<8x128xf32>
    %411 = arith.addf %409, %410 : vector<8x128xf32>
    %412 = arith.mulf %63, %5 : vector<8x128xf32>
    %413 = arith.addf %411, %412 : vector<8x128xf32>
    %cst_93 = arith.constant 0.000000e+00 : f32
    %414 = vector.broadcast %cst_93 : f32 to vector<8x128xf32>
    %415 = arith.mulf %33, %29 : vector<8x128xf32>
    %416 = arith.addf %414, %415 : vector<8x128xf32>
    %417 = arith.mulf %37, %21 : vector<8x128xf32>
    %418 = arith.addf %416, %417 : vector<8x128xf32>
    %419 = arith.mulf %39, %19 : vector<8x128xf32>
    %420 = arith.subf %418, %419 : vector<8x128xf32>
    %421 = arith.mulf %41, %17 : vector<8x128xf32>
    %422 = arith.addf %420, %421 : vector<8x128xf32>
    %423 = arith.mulf %49, %9 : vector<8x128xf32>
    %424 = arith.subf %422, %423 : vector<8x128xf32>
    %425 = arith.mulf %51, %7 : vector<8x128xf32>
    %426 = arith.addf %424, %425 : vector<8x128xf32>
    %427 = arith.mulf %53, %5 : vector<8x128xf32>
    %428 = arith.subf %426, %427 : vector<8x128xf32>
    %429 = arith.mulf %61, %1 : vector<8x128xf32>
    %430 = arith.subf %428, %429 : vector<8x128xf32>
    %cst_94 = arith.constant 0.000000e+00 : f32
    %431 = vector.broadcast %cst_94 : f32 to vector<8x128xf32>
    %432 = arith.mulf %33, %31 : vector<8x128xf32>
    %433 = arith.addf %431, %432 : vector<8x128xf32>
    %434 = arith.mulf %35, %29 : vector<8x128xf32>
    %435 = arith.addf %433, %434 : vector<8x128xf32>
    %436 = arith.mulf %37, %27 : vector<8x128xf32>
    %437 = arith.subf %435, %436 : vector<8x128xf32>
    %438 = arith.mulf %39, %25 : vector<8x128xf32>
    %439 = arith.addf %437, %438 : vector<8x128xf32>
    %440 = arith.mulf %41, %23 : vector<8x128xf32>
    %441 = arith.subf %439, %440 : vector<8x128xf32>
    %442 = arith.mulf %43, %21 : vector<8x128xf32>
    %443 = arith.subf %441, %442 : vector<8x128xf32>
    %444 = arith.mulf %45, %19 : vector<8x128xf32>
    %445 = arith.addf %443, %444 : vector<8x128xf32>
    %446 = arith.mulf %47, %17 : vector<8x128xf32>
    %447 = arith.subf %445, %446 : vector<8x128xf32>
    %448 = arith.mulf %49, %15 : vector<8x128xf32>
    %449 = arith.subf %447, %448 : vector<8x128xf32>
    %450 = arith.mulf %51, %13 : vector<8x128xf32>
    %451 = arith.addf %449, %450 : vector<8x128xf32>
    %452 = arith.mulf %53, %11 : vector<8x128xf32>
    %453 = arith.subf %451, %452 : vector<8x128xf32>
    %454 = arith.mulf %55, %9 : vector<8x128xf32>
    %455 = arith.subf %453, %454 : vector<8x128xf32>
    %456 = arith.mulf %57, %7 : vector<8x128xf32>
    %457 = arith.addf %455, %456 : vector<8x128xf32>
    %458 = arith.mulf %59, %5 : vector<8x128xf32>
    %459 = arith.subf %457, %458 : vector<8x128xf32>
    %460 = arith.mulf %61, %3 : vector<8x128xf32>
    %461 = arith.addf %459, %460 : vector<8x128xf32>
    %462 = arith.mulf %63, %1 : vector<8x128xf32>
    %463 = arith.addf %461, %462 : vector<8x128xf32>
    %cst_95 = arith.constant 0.000000e+00 : f32
    %464 = vector.broadcast %cst_95 : f32 to vector<8x128xf32>
    %465 = arith.mulf %80, %33 : vector<8x128xf32>
    %466 = arith.addf %464, %465 : vector<8x128xf32>
    %467 = arith.mulf %130, %37 : vector<8x128xf32>
    %468 = arith.addf %466, %467 : vector<8x128xf32>
    %469 = arith.mulf %147, %39 : vector<8x128xf32>
    %470 = arith.addf %468, %469 : vector<8x128xf32>
    %471 = arith.mulf %164, %41 : vector<8x128xf32>
    %472 = arith.addf %470, %471 : vector<8x128xf32>
    %473 = arith.mulf %280, %49 : vector<8x128xf32>
    %474 = arith.subf %472, %473 : vector<8x128xf32>
    %475 = arith.mulf %297, %51 : vector<8x128xf32>
    %476 = arith.subf %474, %475 : vector<8x128xf32>
    %477 = arith.mulf %314, %53 : vector<8x128xf32>
    %478 = arith.subf %476, %477 : vector<8x128xf32>
    %479 = arith.mulf %430, %61 : vector<8x128xf32>
    %480 = arith.subf %478, %479 : vector<8x128xf32>
    %c0_96 = arith.constant 0 : index
    %c0_97 = arith.constant 0 : index
    %c0_98 = arith.constant 0 : index
    %481 = vector.load %arg3[%c0_96, %c0_97, %c0_98] : memref<16x8x128xf32, #tpu.memory_space<vmem>>, vector<1x8x128xf32>
    %482 = vector.shape_cast %481 : vector<1x8x128xf32> to vector<8x128xf32>
    %483 = vector.shape_cast %480 : vector<8x128xf32> to vector<1x8x128xf32>
    tpu.vector_store %arg3[%c0_96, %c0_97, %c0_98], %483 {strides = array<i32>} : memref<16x8x128xf32, #tpu.memory_space<vmem>>, vector<1x8x128xf32>,
    %cst_99 = arith.constant 0.000000e+00 : f32
    %484 = vector.broadcast %cst_99 : f32 to vector<8x128xf32>
    %485 = arith.mulf %80, %35 : vector<8x128xf32>
    %486 = arith.addf %484, %485 : vector<8x128xf32>
    %487 = arith.mulf %113, %33 : vector<8x128xf32>
    %488 = arith.addf %486, %487 : vector<8x128xf32>
    %489 = arith.mulf %130, %43 : vector<8x128xf32>
    %490 = arith.subf %488, %489 : vector<8x128xf32>
    %491 = arith.mulf %147, %45 : vector<8x128xf32>
    %492 = arith.subf %490, %491 : vector<8x128xf32>
    %493 = arith.mulf %164, %47 : vector<8x128xf32>
    %494 = arith.subf %492, %493 : vector<8x128xf32>
    %495 = arith.mulf %197, %37 : vector<8x128xf32>
    %496 = arith.addf %494, %495 : vector<8x128xf32>
    %497 = arith.mulf %230, %39 : vector<8x128xf32>
    %498 = arith.addf %496, %497 : vector<8x128xf32>
    %499 = arith.mulf %263, %41 : vector<8x128xf32>
    %500 = arith.addf %498, %499 : vector<8x128xf32>
    %501 = arith.mulf %280, %55 : vector<8x128xf32>
    %502 = arith.subf %500, %501 : vector<8x128xf32>
    %503 = arith.mulf %297, %57 : vector<8x128xf32>
    %504 = arith.subf %502, %503 : vector<8x128xf32>
    %505 = arith.mulf %314, %59 : vector<8x128xf32>
    %506 = arith.subf %504, %505 : vector<8x128xf32>
    %507 = arith.mulf %347, %49 : vector<8x128xf32>
    %508 = arith.subf %506, %507 : vector<8x128xf32>
    %509 = arith.mulf %380, %51 : vector<8x128xf32>
    %510 = arith.subf %508, %509 : vector<8x128xf32>
    %511 = arith.mulf %413, %53 : vector<8x128xf32>
    %512 = arith.subf %510, %511 : vector<8x128xf32>
    %513 = arith.mulf %430, %63 : vector<8x128xf32>
    %514 = arith.addf %512, %513 : vector<8x128xf32>
    %515 = arith.mulf %463, %61 : vector<8x128xf32>
    %516 = arith.subf %514, %515 : vector<8x128xf32>
    %c1_100 = arith.constant 1 : index
    %c0_101 = arith.constant 0 : index
    %c0_102 = arith.constant 0 : index
    %517 = vector.load %arg3[%c1_100, %c0_101, %c0_102] : memref<16x8x128xf32, #tpu.memory_space<vmem>>, vector<1x8x128xf32>
    %518 = vector.shape_cast %517 : vector<1x8x128xf32> to vector<8x128xf32>
    %519 = vector.shape_cast %516 : vector<8x128xf32> to vector<1x8x128xf32>
    tpu.vector_store %arg3[%c1_100, %c0_101, %c0_102], %519 {strides = array<i32>} : memref<16x8x128xf32, #tpu.memory_space<vmem>>, vector<1x8x128xf32>,
    %cst_103 = arith.constant 0.000000e+00 : f32
    %520 = vector.broadcast %cst_103 : f32 to vector<8x128xf32>
    %521 = arith.mulf %80, %37 : vector<8x128xf32>
    %522 = arith.addf %520, %521 : vector<8x128xf32>
    %523 = arith.mulf %130, %33 : vector<8x128xf32>
    %524 = arith.addf %522, %523 : vector<8x128xf32>
    %525 = arith.mulf %147, %49 : vector<8x128xf32>
    %526 = arith.subf %524, %525 : vector<8x128xf32>
    %527 = arith.mulf %164, %51 : vector<8x128xf32>
    %528 = arith.subf %526, %527 : vector<8x128xf32>
    %529 = arith.mulf %280, %39 : vector<8x128xf32>
    %530 = arith.addf %528, %529 : vector<8x128xf32>
    %531 = arith.mulf %297, %41 : vector<8x128xf32>
    %532 = arith.addf %530, %531 : vector<8x128xf32>
    %533 = arith.mulf %314, %61 : vector<8x128xf32>
    %534 = arith.subf %532, %533 : vector<8x128xf32>
    %535 = arith.mulf %430, %53 : vector<8x128xf32>
    %536 = arith.subf %534, %535 : vector<8x128xf32>
    %c2_104 = arith.constant 2 : index
    %c0_105 = arith.constant 0 : index
    %c0_106 = arith.constant 0 : index
    %537 = vector.load %arg3[%c2_104, %c0_105, %c0_106] : memref<16x8x128xf32, #tpu.memory_space<vmem>>, vector<1x8x128xf32>
    %538 = vector.shape_cast %537 : vector<1x8x128xf32> to vector<8x128xf32>
    %539 = vector.shape_cast %536 : vector<8x128xf32> to vector<1x8x128xf32>
    tpu.vector_store %arg3[%c2_104, %c0_105, %c0_106], %539 {strides = array<i32>} : memref<16x8x128xf32, #tpu.memory_space<vmem>>, vector<1x8x128xf32>,
    %cst_107 = arith.constant 0.000000e+00 : f32
    %540 = vector.broadcast %cst_107 : f32 to vector<8x128xf32>
    %541 = arith.mulf %80, %39 : vector<8x128xf32>
    %542 = arith.addf %540, %541 : vector<8x128xf32>
    %543 = arith.mulf %130, %49 : vector<8x128xf32>
    %544 = arith.addf %542, %543 : vector<8x128xf32>
    %545 = arith.mulf %147, %33 : vector<8x128xf32>
    %546 = arith.addf %544, %545 : vector<8x128xf32>
    %547 = arith.mulf %164, %53 : vector<8x128xf32>
    %548 = arith.subf %546, %547 : vector<8x128xf32>
    %549 = arith.mulf %280, %37 : vector<8x128xf32>
    %550 = arith.subf %548, %549 : vector<8x128xf32>
    %551 = arith.mulf %297, %61 : vector<8x128xf32>
    %552 = arith.addf %550, %551 : vector<8x128xf32>
    %553 = arith.mulf %314, %41 : vector<8x128xf32>
    %554 = arith.addf %552, %553 : vector<8x128xf32>
    %555 = arith.mulf %430, %51 : vector<8x128xf32>
    %556 = arith.addf %554, %555 : vector<8x128xf32>
    %c3_108 = arith.constant 3 : index
    %c0_109 = arith.constant 0 : index
    %c0_110 = arith.constant 0 : index
    %557 = vector.load %arg3[%c3_108, %c0_109, %c0_110] : memref<16x8x128xf32, #tpu.memory_space<vmem>>, vector<1x8x128xf32>
    %558 = vector.shape_cast %557 : vector<1x8x128xf32> to vector<8x128xf32>
    %559 = vector.shape_cast %556 : vector<8x128xf32> to vector<1x8x128xf32>
    tpu.vector_store %arg3[%c3_108, %c0_109, %c0_110], %559 {strides = array<i32>} : memref<16x8x128xf32, #tpu.memory_space<vmem>>, vector<1x8x128xf32>,
    %cst_111 = arith.constant 0.000000e+00 : f32
    %560 = vector.broadcast %cst_111 : f32 to vector<8x128xf32>
    %561 = arith.mulf %80, %41 : vector<8x128xf32>
    %562 = arith.addf %560, %561 : vector<8x128xf32>
    %563 = arith.mulf %130, %51 : vector<8x128xf32>
    %564 = arith.addf %562, %563 : vector<8x128xf32>
    %565 = arith.mulf %147, %53 : vector<8x128xf32>
    %566 = arith.addf %564, %565 : vector<8x128xf32>
    %567 = arith.mulf %164, %33 : vector<8x128xf32>
    %568 = arith.addf %566, %567 : vector<8x128xf32>
    %569 = arith.mulf %280, %61 : vector<8x128xf32>
    %570 = arith.subf %568, %569 : vector<8x128xf32>
    %571 = arith.mulf %297, %37 : vector<8x128xf32>
    %572 = arith.subf %570, %571 : vector<8x128xf32>
    %573 = arith.mulf %314, %39 : vector<8x128xf32>
    %574 = arith.subf %572, %573 : vector<8x128xf32>
    %575 = arith.mulf %430, %49 : vector<8x128xf32>
    %576 = arith.subf %574, %575 : vector<8x128xf32>
    %c4_112 = arith.constant 4 : index
    %c0_113 = arith.constant 0 : index
    %c0_114 = arith.constant 0 : index
    %577 = vector.load %arg3[%c4_112, %c0_113, %c0_114] : memref<16x8x128xf32, #tpu.memory_space<vmem>>, vector<1x8x128xf32>
    %578 = vector.shape_cast %577 : vector<1x8x128xf32> to vector<8x128xf32>
    %579 = vector.shape_cast %576 : vector<8x128xf32> to vector<1x8x128xf32>
    tpu.vector_store %arg3[%c4_112, %c0_113, %c0_114], %579 {strides = array<i32>} : memref<16x8x128xf32, #tpu.memory_space<vmem>>, vector<1x8x128xf32>,
    %cst_115 = arith.constant 0.000000e+00 : f32
    %580 = vector.broadcast %cst_115 : f32 to vector<8x128xf32>
    %581 = arith.mulf %80, %43 : vector<8x128xf32>
    %582 = arith.addf %580, %581 : vector<8x128xf32>
    %583 = arith.mulf %113, %37 : vector<8x128xf32>
    %584 = arith.addf %582, %583 : vector<8x128xf32>
    %585 = arith.mulf %130, %35 : vector<8x128xf32>
    %586 = arith.subf %584, %585 : vector<8x128xf32>
    %587 = arith.mulf %147, %55 : vector<8x128xf32>
    %588 = arith.addf %586, %587 : vector<8x128xf32>
    %589 = arith.mulf %164, %57 : vector<8x128xf32>
    %590 = arith.addf %588, %589 : vector<8x128xf32>
    %591 = arith.mulf %197, %33 : vector<8x128xf32>
    %592 = arith.addf %590, %591 : vector<8x128xf32>
    %593 = arith.mulf %230, %49 : vector<8x128xf32>
    %594 = arith.subf %592, %593 : vector<8x128xf32>
    %595 = arith.mulf %263, %51 : vector<8x128xf32>
    %596 = arith.subf %594, %595 : vector<8x128xf32>
    %597 = arith.mulf %280, %45 : vector<8x128xf32>
    %598 = arith.addf %596, %597 : vector<8x128xf32>
    %599 = arith.mulf %297, %47 : vector<8x128xf32>
    %600 = arith.addf %598, %599 : vector<8x128xf32>
    %601 = arith.mulf %314, %63 : vector<8x128xf32>
    %602 = arith.subf %600, %601 : vector<8x128xf32>
    %603 = arith.mulf %347, %39 : vector<8x128xf32>
    %604 = arith.addf %602, %603 : vector<8x128xf32>
    %605 = arith.mulf %380, %41 : vector<8x128xf32>
    %606 = arith.addf %604, %605 : vector<8x128xf32>
    %607 = arith.mulf %413, %61 : vector<8x128xf32>
    %608 = arith.subf %606, %607 : vector<8x128xf32>
    %609 = arith.mulf %430, %59 : vector<8x128xf32>
    %610 = arith.addf %608, %609 : vector<8x128xf32>
    %611 = arith.mulf %463, %53 : vector<8x128xf32>
    %612 = arith.subf %610, %611 : vector<8x128xf32>
    %c5_116 = arith.constant 5 : index
    %c0_117 = arith.constant 0 : index
    %c0_118 = arith.constant 0 : index
    %613 = vector.load %arg3[%c5_116, %c0_117, %c0_118] : memref<16x8x128xf32, #tpu.memory_space<vmem>>, vector<1x8x128xf32>
    %614 = vector.shape_cast %613 : vector<1x8x128xf32> to vector<8x128xf32>
    %615 = vector.shape_cast %612 : vector<8x128xf32> to vector<1x8x128xf32>
    tpu.vector_store %arg3[%c5_116, %c0_117, %c0_118], %615 {strides = array<i32>} : memref<16x8x128xf32, #tpu.memory_space<vmem>>, vector<1x8x128xf32>,
    %cst_119 = arith.constant 0.000000e+00 : f32
    %616 = vector.broadcast %cst_119 : f32 to vector<8x128xf32>
    %617 = arith.mulf %80, %45 : vector<8x128xf32>
    %618 = arith.addf %616, %617 : vector<8x128xf32>
    %619 = arith.mulf %113, %39 : vector<8x128xf32>
    %620 = arith.addf %618, %619 : vector<8x128xf32>
    %621 = arith.mulf %130, %55 : vector<8x128xf32>
    %622 = arith.subf %620, %621 : vector<8x128xf32>
    %623 = arith.mulf %147, %35 : vector<8x128xf32>
    %624 = arith.subf %622, %623 : vector<8x128xf32>
    %625 = arith.mulf %164, %59 : vector<8x128xf32>
    %626 = arith.addf %624, %625 : vector<8x128xf32>
    %627 = arith.mulf %197, %49 : vector<8x128xf32>
    %628 = arith.addf %626, %627 : vector<8x128xf32>
    %629 = arith.mulf %230, %33 : vector<8x128xf32>
    %630 = arith.addf %628, %629 : vector<8x128xf32>
    %631 = arith.mulf %263, %53 : vector<8x128xf32>
    %632 = arith.subf %630, %631 : vector<8x128xf32>
    %633 = arith.mulf %280, %43 : vector<8x128xf32>
    %634 = arith.subf %632, %633 : vector<8x128xf32>
    %635 = arith.mulf %297, %63 : vector<8x128xf32>
    %636 = arith.addf %634, %635 : vector<8x128xf32>
    %637 = arith.mulf %314, %47 : vector<8x128xf32>
    %638 = arith.addf %636, %637 : vector<8x128xf32>
    %639 = arith.mulf %347, %37 : vector<8x128xf32>
    %640 = arith.subf %638, %639 : vector<8x128xf32>
    %641 = arith.mulf %380, %61 : vector<8x128xf32>
    %642 = arith.addf %640, %641 : vector<8x128xf32>
    %643 = arith.mulf %413, %41 : vector<8x128xf32>
    %644 = arith.addf %642, %643 : vector<8x128xf32>
    %645 = arith.mulf %430, %57 : vector<8x128xf32>
    %646 = arith.subf %644, %645 : vector<8x128xf32>
    %647 = arith.mulf %463, %51 : vector<8x128xf32>
    %648 = arith.addf %646, %647 : vector<8x128xf32>
    %c6_120 = arith.constant 6 : index
    %c0_121 = arith.constant 0 : index
    %c0_122 = arith.constant 0 : index
    %649 = vector.load %arg3[%c6_120, %c0_121, %c0_122] : memref<16x8x128xf32, #tpu.memory_space<vmem>>, vector<1x8x128xf32>
    %650 = vector.shape_cast %649 : vector<1x8x128xf32> to vector<8x128xf32>
    %651 = vector.shape_cast %648 : vector<8x128xf32> to vector<1x8x128xf32>
    tpu.vector_store %arg3[%c6_120, %c0_121, %c0_122], %651 {strides = array<i32>} : memref<16x8x128xf32, #tpu.memory_space<vmem>>, vector<1x8x128xf32>,
    %cst_123 = arith.constant 0.000000e+00 : f32
    %652 = vector.broadcast %cst_123 : f32 to vector<8x128xf32>
    %653 = arith.mulf %80, %47 : vector<8x128xf32>
    %654 = arith.addf %652, %653 : vector<8x128xf32>
    %655 = arith.mulf %113, %41 : vector<8x128xf32>
    %656 = arith.addf %654, %655 : vector<8x128xf32>
    %657 = arith.mulf %130, %57 : vector<8x128xf32>
    %658 = arith.subf %656, %657 : vector<8x128xf32>
    %659 = arith.mulf %147, %59 : vector<8x128xf32>
    %660 = arith.subf %658, %659 : vector<8x128xf32>
    %661 = arith.mulf %164, %35 : vector<8x128xf32>
    %662 = arith.subf %660, %661 : vector<8x128xf32>
    %663 = arith.mulf %197, %51 : vector<8x128xf32>
    %664 = arith.addf %662, %663 : vector<8x128xf32>
    %665 = arith.mulf %230, %53 : vector<8x128xf32>
    %666 = arith.addf %664, %665 : vector<8x128xf32>
    %667 = arith.mulf %263, %33 : vector<8x128xf32>
    %668 = arith.addf %666, %667 : vector<8x128xf32>
    %669 = arith.mulf %280, %63 : vector<8x128xf32>
    %670 = arith.subf %668, %669 : vector<8x128xf32>
    %671 = arith.mulf %297, %43 : vector<8x128xf32>
    %672 = arith.subf %670, %671 : vector<8x128xf32>
    %673 = arith.mulf %314, %45 : vector<8x128xf32>
    %674 = arith.subf %672, %673 : vector<8x128xf32>
    %675 = arith.mulf %347, %61 : vector<8x128xf32>
    %676 = arith.subf %674, %675 : vector<8x128xf32>
    %677 = arith.mulf %380, %37 : vector<8x128xf32>
    %678 = arith.subf %676, %677 : vector<8x128xf32>
    %679 = arith.mulf %413, %39 : vector<8x128xf32>
    %680 = arith.subf %678, %679 : vector<8x128xf32>
    %681 = arith.mulf %430, %55 : vector<8x128xf32>
    %682 = arith.addf %680, %681 : vector<8x128xf32>
    %683 = arith.mulf %463, %49 : vector<8x128xf32>
    %684 = arith.subf %682, %683 : vector<8x128xf32>
    %c7_124 = arith.constant 7 : index
    %c0_125 = arith.constant 0 : index
    %c0_126 = arith.constant 0 : index
    %685 = vector.load %arg3[%c7_124, %c0_125, %c0_126] : memref<16x8x128xf32, #tpu.memory_space<vmem>>, vector<1x8x128xf32>
    %686 = vector.shape_cast %685 : vector<1x8x128xf32> to vector<8x128xf32>
    %687 = vector.shape_cast %684 : vector<8x128xf32> to vector<1x8x128xf32>
    tpu.vector_store %arg3[%c7_124, %c0_125, %c0_126], %687 {strides = array<i32>} : memref<16x8x128xf32, #tpu.memory_space<vmem>>, vector<1x8x128xf32>,
    %cst_127 = arith.constant 0.000000e+00 : f32
    %688 = vector.broadcast %cst_127 : f32 to vector<8x128xf32>
    %689 = arith.mulf %80, %49 : vector<8x128xf32>
    %690 = arith.addf %688, %689 : vector<8x128xf32>
    %691 = arith.mulf %130, %39 : vector<8x128xf32>
    %692 = arith.addf %690, %691 : vector<8x128xf32>
    %693 = arith.mulf %147, %37 : vector<8x128xf32>
    %694 = arith.subf %692, %693 : vector<8x128xf32>
    %695 = arith.mulf %164, %61 : vector<8x128xf32>
    %696 = arith.addf %694, %695 : vector<8x128xf32>
    %697 = arith.mulf %280, %33 : vector<8x128xf32>
    %698 = arith.addf %696, %697 : vector<8x128xf32>
    %699 = arith.mulf %297, %53 : vector<8x128xf32>
    %700 = arith.subf %698, %699 : vector<8x128xf32>
    %701 = arith.mulf %314, %51 : vector<8x128xf32>
    %702 = arith.addf %700, %701 : vector<8x128xf32>
    %703 = arith.mulf %430, %41 : vector<8x128xf32>
    %704 = arith.addf %702, %703 : vector<8x128xf32>
    %c8_128 = arith.constant 8 : index
    %c0_129 = arith.constant 0 : index
    %c0_130 = arith.constant 0 : index
    %705 = vector.load %arg3[%c8_128, %c0_129, %c0_130] : memref<16x8x128xf32, #tpu.memory_space<vmem>>, vector<1x8x128xf32>
    %706 = vector.shape_cast %705 : vector<1x8x128xf32> to vector<8x128xf32>
    %707 = vector.shape_cast %704 : vector<8x128xf32> to vector<1x8x128xf32>
    tpu.vector_store %arg3[%c8_128, %c0_129, %c0_130], %707 {strides = array<i32>} : memref<16x8x128xf32, #tpu.memory_space<vmem>>, vector<1x8x128xf32>,
    %cst_131 = arith.constant 0.000000e+00 : f32
    %708 = vector.broadcast %cst_131 : f32 to vector<8x128xf32>
    %709 = arith.mulf %80, %51 : vector<8x128xf32>
    %710 = arith.addf %708, %709 : vector<8x128xf32>
    %711 = arith.mulf %130, %41 : vector<8x128xf32>
    %712 = arith.addf %710, %711 : vector<8x128xf32>
    %713 = arith.mulf %147, %61 : vector<8x128xf32>
    %714 = arith.subf %712, %713 : vector<8x128xf32>
    %715 = arith.mulf %164, %37 : vector<8x128xf32>
    %716 = arith.subf %714, %715 : vector<8x128xf32>
    %717 = arith.mulf %280, %53 : vector<8x128xf32>
    %718 = arith.addf %716, %717 : vector<8x128xf32>
    %719 = arith.mulf %297, %33 : vector<8x128xf32>
    %720 = arith.addf %718, %719 : vector<8x128xf32>
    %721 = arith.mulf %314, %49 : vector<8x128xf32>
    %722 = arith.subf %720, %721 : vector<8x128xf32>
    %723 = arith.mulf %430, %39 : vector<8x128xf32>
    %724 = arith.subf %722, %723 : vector<8x128xf32>
    %c9_132 = arith.constant 9 : index
    %c0_133 = arith.constant 0 : index
    %c0_134 = arith.constant 0 : index
    %725 = vector.load %arg3[%c9_132, %c0_133, %c0_134] : memref<16x8x128xf32, #tpu.memory_space<vmem>>, vector<1x8x128xf32>
    %726 = vector.shape_cast %725 : vector<1x8x128xf32> to vector<8x128xf32>
    %727 = vector.shape_cast %724 : vector<8x128xf32> to vector<1x8x128xf32>
    tpu.vector_store %arg3[%c9_132, %c0_133, %c0_134], %727 {strides = array<i32>} : memref<16x8x128xf32, #tpu.memory_space<vmem>>, vector<1x8x128xf32>,
    %cst_135 = arith.constant 0.000000e+00 : f32
    %728 = vector.broadcast %cst_135 : f32 to vector<8x128xf32>
    %729 = arith.mulf %80, %53 : vector<8x128xf32>
    %730 = arith.addf %728, %729 : vector<8x128xf32>
    %731 = arith.mulf %130, %61 : vector<8x128xf32>
    %732 = arith.addf %730, %731 : vector<8x128xf32>
    %733 = arith.mulf %147, %41 : vector<8x128xf32>
    %734 = arith.addf %732, %733 : vector<8x128xf32>
    %735 = arith.mulf %164, %39 : vector<8x128xf32>
    %736 = arith.subf %734, %735 : vector<8x128xf32>
    %737 = arith.mulf %280, %51 : vector<8x128xf32>
    %738 = arith.subf %736, %737 : vector<8x128xf32>
    %739 = arith.mulf %297, %49 : vector<8x128xf32>
    %740 = arith.addf %738, %739 : vector<8x128xf32>
    %741 = arith.mulf %314, %33 : vector<8x128xf32>
    %742 = arith.addf %740, %741 : vector<8x128xf32>
    %743 = arith.mulf %430, %37 : vector<8x128xf32>
    %744 = arith.addf %742, %743 : vector<8x128xf32>
    %c10_136 = arith.constant 10 : index
    %c0_137 = arith.constant 0 : index
    %c0_138 = arith.constant 0 : index
    %745 = vector.load %arg3[%c10_136, %c0_137, %c0_138] : memref<16x8x128xf32, #tpu.memory_space<vmem>>, vector<1x8x128xf32>
    %746 = vector.shape_cast %745 : vector<1x8x128xf32> to vector<8x128xf32>
    %747 = vector.shape_cast %744 : vector<8x128xf32> to vector<1x8x128xf32>
    tpu.vector_store %arg3[%c10_136, %c0_137, %c0_138], %747 {strides = array<i32>} : memref<16x8x128xf32, #tpu.memory_space<vmem>>, vector<1x8x128xf32>,
    %cst_139 = arith.constant 0.000000e+00 : f32
    %748 = vector.broadcast %cst_139 : f32 to vector<8x128xf32>
    %749 = arith.mulf %80, %55 : vector<8x128xf32>
    %750 = arith.addf %748, %749 : vector<8x128xf32>
    %751 = arith.mulf %113, %49 : vector<8x128xf32>
    %752 = arith.addf %750, %751 : vector<8x128xf32>
    %753 = arith.mulf %130, %45 : vector<8x128xf32>
    %754 = arith.subf %752, %753 : vector<8x128xf32>
    %755 = arith.mulf %147, %43 : vector<8x128xf32>
    %756 = arith.addf %754, %755 : vector<8x128xf32>
    %757 = arith.mulf %164, %63 : vector<8x128xf32>
    %758 = arith.subf %756, %757 : vector<8x128xf32>
    %759 = arith.mulf %197, %39 : vector<8x128xf32>
    %760 = arith.addf %758, %759 : vector<8x128xf32>
    %761 = arith.mulf %230, %37 : vector<8x128xf32>
    %762 = arith.subf %760, %761 : vector<8x128xf32>
    %763 = arith.mulf %263, %61 : vector<8x128xf32>
    %764 = arith.addf %762, %763 : vector<8x128xf32>
    %765 = arith.mulf %280, %35 : vector<8x128xf32>
    %766 = arith.addf %764, %765 : vector<8x128xf32>
    %767 = arith.mulf %297, %59 : vector<8x128xf32>
    %768 = arith.subf %766, %767 : vector<8x128xf32>
    %769 = arith.mulf %314, %57 : vector<8x128xf32>
    %770 = arith.addf %768, %769 : vector<8x128xf32>
    %771 = arith.mulf %347, %33 : vector<8x128xf32>
    %772 = arith.addf %770, %771 : vector<8x128xf32>
    %773 = arith.mulf %380, %53 : vector<8x128xf32>
    %774 = arith.subf %772, %773 : vector<8x128xf32>
    %775 = arith.mulf %413, %51 : vector<8x128xf32>
    %776 = arith.addf %774, %775 : vector<8x128xf32>
    %777 = arith.mulf %430, %47 : vector<8x128xf32>
    %778 = arith.subf %776, %777 : vector<8x128xf32>
    %779 = arith.mulf %463, %41 : vector<8x128xf32>
    %780 = arith.addf %778, %779 : vector<8x128xf32>
    %c11_140 = arith.constant 11 : index
    %c0_141 = arith.constant 0 : index
    %c0_142 = arith.constant 0 : index
    %781 = vector.load %arg3[%c11_140, %c0_141, %c0_142] : memref<16x8x128xf32, #tpu.memory_space<vmem>>, vector<1x8x128xf32>
    %782 = vector.shape_cast %781 : vector<1x8x128xf32> to vector<8x128xf32>
    %783 = vector.shape_cast %780 : vector<8x128xf32> to vector<1x8x128xf32>
    tpu.vector_store %arg3[%c11_140, %c0_141, %c0_142], %783 {strides = array<i32>} : memref<16x8x128xf32, #tpu.memory_space<vmem>>, vector<1x8x128xf32>,
    %cst_143 = arith.constant 0.000000e+00 : f32
    %784 = vector.broadcast %cst_143 : f32 to vector<8x128xf32>
    %785 = arith.mulf %80, %57 : vector<8x128xf32>
    %786 = arith.addf %784, %785 : vector<8x128xf32>
    %787 = arith.mulf %113, %51 : vector<8x128xf32>
    %788 = arith.addf %786, %787 : vector<8x128xf32>
    %789 = arith.mulf %130, %47 : vector<8x128xf32>
    %790 = arith.subf %788, %789 : vector<8x128xf32>
    %791 = arith.mulf %147, %63 : vector<8x128xf32>
    %792 = arith.addf %790, %791 : vector<8x128xf32>
    %793 = arith.mulf %164, %43 : vector<8x128xf32>
    %794 = arith.addf %792, %793 : vector<8x128xf32>
    %795 = arith.mulf %197, %41 : vector<8x128xf32>
    %796 = arith.addf %794, %795 : vector<8x128xf32>
    %797 = arith.mulf %230, %61 : vector<8x128xf32>
    %798 = arith.subf %796, %797 : vector<8x128xf32>
    %799 = arith.mulf %263, %37 : vector<8x128xf32>
    %800 = arith.subf %798, %799 : vector<8x128xf32>
    %801 = arith.mulf %280, %59 : vector<8x128xf32>
    %802 = arith.addf %800, %801 : vector<8x128xf32>
    %803 = arith.mulf %297, %35 : vector<8x128xf32>
    %804 = arith.addf %802, %803 : vector<8x128xf32>
    %805 = arith.mulf %314, %55 : vector<8x128xf32>
    %806 = arith.subf %804, %805 : vector<8x128xf32>
    %807 = arith.mulf %347, %53 : vector<8x128xf32>
    %808 = arith.addf %806, %807 : vector<8x128xf32>
    %809 = arith.mulf %380, %33 : vector<8x128xf32>
    %810 = arith.addf %808, %809 : vector<8x128xf32>
    %811 = arith.mulf %413, %49 : vector<8x128xf32>
    %812 = arith.subf %810, %811 : vector<8x128xf32>
    %813 = arith.mulf %430, %45 : vector<8x128xf32>
    %814 = arith.addf %812, %813 : vector<8x128xf32>
    %815 = arith.mulf %463, %39 : vector<8x128xf32>
    %816 = arith.subf %814, %815 : vector<8x128xf32>
    %c12_144 = arith.constant 12 : index
    %c0_145 = arith.constant 0 : index
    %c0_146 = arith.constant 0 : index
    %817 = vector.load %arg3[%c12_144, %c0_145, %c0_146] : memref<16x8x128xf32, #tpu.memory_space<vmem>>, vector<1x8x128xf32>
    %818 = vector.shape_cast %817 : vector<1x8x128xf32> to vector<8x128xf32>
    %819 = vector.shape_cast %816 : vector<8x128xf32> to vector<1x8x128xf32>
    tpu.vector_store %arg3[%c12_144, %c0_145, %c0_146], %819 {strides = array<i32>} : memref<16x8x128xf32, #tpu.memory_space<vmem>>, vector<1x8x128xf32>,
    %cst_147 = arith.constant 0.000000e+00 : f32
    %820 = vector.broadcast %cst_147 : f32 to vector<8x128xf32>
    %821 = arith.mulf %80, %59 : vector<8x128xf32>
    %822 = arith.addf %820, %821 : vector<8x128xf32>
    %823 = arith.mulf %113, %53 : vector<8x128xf32>
    %824 = arith.addf %822, %823 : vector<8x128xf32>
    %825 = arith.mulf %130, %63 : vector<8x128xf32>
    %826 = arith.subf %824, %825 : vector<8x128xf32>
    %827 = arith.mulf %147, %47 : vector<8x128xf32>
    %828 = arith.subf %826, %827 : vector<8x128xf32>
    %829 = arith.mulf %164, %45 : vector<8x128xf32>
    %830 = arith.addf %828, %829 : vector<8x128xf32>
    %831 = arith.mulf %197, %61 : vector<8x128xf32>
    %832 = arith.addf %830, %831 : vector<8x128xf32>
    %833 = arith.mulf %230, %41 : vector<8x128xf32>
    %834 = arith.addf %832, %833 : vector<8x128xf32>
    %835 = arith.mulf %263, %39 : vector<8x128xf32>
    %836 = arith.subf %834, %835 : vector<8x128xf32>
    %837 = arith.mulf %280, %57 : vector<8x128xf32>
    %838 = arith.subf %836, %837 : vector<8x128xf32>
    %839 = arith.mulf %297, %55 : vector<8x128xf32>
    %840 = arith.addf %838, %839 : vector<8x128xf32>
    %841 = arith.mulf %314, %35 : vector<8x128xf32>
    %842 = arith.addf %840, %841 : vector<8x128xf32>
    %843 = arith.mulf %347, %51 : vector<8x128xf32>
    %844 = arith.subf %842, %843 : vector<8x128xf32>
    %845 = arith.mulf %380, %49 : vector<8x128xf32>
    %846 = arith.addf %844, %845 : vector<8x128xf32>
    %847 = arith.mulf %413, %33 : vector<8x128xf32>
    %848 = arith.addf %846, %847 : vector<8x128xf32>
    %849 = arith.mulf %430, %43 : vector<8x128xf32>
    %850 = arith.subf %848, %849 : vector<8x128xf32>
    %851 = arith.mulf %463, %37 : vector<8x128xf32>
    %852 = arith.addf %850, %851 : vector<8x128xf32>
    %c13_148 = arith.constant 13 : index
    %c0_149 = arith.constant 0 : index
    %c0_150 = arith.constant 0 : index
    %853 = vector.load %arg3[%c13_148, %c0_149, %c0_150] : memref<16x8x128xf32, #tpu.memory_space<vmem>>, vector<1x8x128xf32>
    %854 = vector.shape_cast %853 : vector<1x8x128xf32> to vector<8x128xf32>
    %855 = vector.shape_cast %852 : vector<8x128xf32> to vector<1x8x128xf32>
    tpu.vector_store %arg3[%c13_148, %c0_149, %c0_150], %855 {strides = array<i32>} : memref<16x8x128xf32, #tpu.memory_space<vmem>>, vector<1x8x128xf32>,
    %cst_151 = arith.constant 0.000000e+00 : f32
    %856 = vector.broadcast %cst_151 : f32 to vector<8x128xf32>
    %857 = arith.mulf %80, %61 : vector<8x128xf32>
    %858 = arith.addf %856, %857 : vector<8x128xf32>
    %859 = arith.mulf %130, %53 : vector<8x128xf32>
    %860 = arith.addf %858, %859 : vector<8x128xf32>
    %861 = arith.mulf %147, %51 : vector<8x128xf32>
    %862 = arith.subf %860, %861 : vector<8x128xf32>
    %863 = arith.mulf %164, %49 : vector<8x128xf32>
    %864 = arith.addf %862, %863 : vector<8x128xf32>
    %865 = arith.mulf %280, %41 : vector<8x128xf32>
    %866 = arith.addf %864, %865 : vector<8x128xf32>
    %867 = arith.mulf %297, %39 : vector<8x128xf32>
    %868 = arith.subf %866, %867 : vector<8x128xf32>
    %869 = arith.mulf %314, %37 : vector<8x128xf32>
    %870 = arith.addf %868, %869 : vector<8x128xf32>
    %871 = arith.mulf %430, %33 : vector<8x128xf32>
    %872 = arith.addf %870, %871 : vector<8x128xf32>
    %c14_152 = arith.constant 14 : index
    %c0_153 = arith.constant 0 : index
    %c0_154 = arith.constant 0 : index
    %873 = vector.load %arg3[%c14_152, %c0_153, %c0_154] : memref<16x8x128xf32, #tpu.memory_space<vmem>>, vector<1x8x128xf32>
    %874 = vector.shape_cast %873 : vector<1x8x128xf32> to vector<8x128xf32>
    %875 = vector.shape_cast %872 : vector<8x128xf32> to vector<1x8x128xf32>
    tpu.vector_store %arg3[%c14_152, %c0_153, %c0_154], %875 {strides = array<i32>} : memref<16x8x128xf32, #tpu.memory_space<vmem>>, vector<1x8x128xf32>,
    %cst_155 = arith.constant 0.000000e+00 : f32
    %876 = vector.broadcast %cst_155 : f32 to vector<8x128xf32>
    %877 = arith.mulf %80, %63 : vector<8x128xf32>
    %878 = arith.addf %876, %877 : vector<8x128xf32>
    %879 = arith.mulf %113, %61 : vector<8x128xf32>
    %880 = arith.addf %878, %879 : vector<8x128xf32>
    %881 = arith.mulf %130, %59 : vector<8x128xf32>
    %882 = arith.subf %880, %881 : vector<8x128xf32>
    %883 = arith.mulf %147, %57 : vector<8x128xf32>
    %884 = arith.addf %882, %883 : vector<8x128xf32>
    %885 = arith.mulf %164, %55 : vector<8x128xf32>
    %886 = arith.subf %884, %885 : vector<8x128xf32>
    %887 = arith.mulf %197, %53 : vector<8x128xf32>
    %888 = arith.addf %886, %887 : vector<8x128xf32>
    %889 = arith.mulf %230, %51 : vector<8x128xf32>
    %890 = arith.subf %888, %889 : vector<8x128xf32>
    %891 = arith.mulf %263, %49 : vector<8x128xf32>
    %892 = arith.addf %890, %891 : vector<8x128xf32>
    %893 = arith.mulf %280, %47 : vector<8x128xf32>
    %894 = arith.addf %892, %893 : vector<8x128xf32>
    %895 = arith.mulf %297, %45 : vector<8x128xf32>
    %896 = arith.subf %894, %895 : vector<8x128xf32>
    %897 = arith.mulf %314, %43 : vector<8x128xf32>
    %898 = arith.addf %896, %897 : vector<8x128xf32>
    %899 = arith.mulf %347, %41 : vector<8x128xf32>
    %900 = arith.addf %898, %899 : vector<8x128xf32>
    %901 = arith.mulf %380, %39 : vector<8x128xf32>
    %902 = arith.subf %900, %901 : vector<8x128xf32>
    %903 = arith.mulf %413, %37 : vector<8x128xf32>
    %904 = arith.addf %902, %903 : vector<8x128xf32>
    %905 = arith.mulf %430, %35 : vector<8x128xf32>
    %906 = arith.subf %904, %905 : vector<8x128xf32>
    %907 = arith.mulf %463, %33 : vector<8x128xf32>
    %908 = arith.addf %906, %907 : vector<8x128xf32>
    %c15_156 = arith.constant 15 : index
    %c0_157 = arith.constant 0 : index
    %c0_158 = arith.constant 0 : index
    %909 = vector.load %arg3[%c15_156, %c0_157, %c0_158] : memref<16x8x128xf32, #tpu.memory_space<vmem>>, vector<1x8x128xf32>
    %910 = vector.shape_cast %909 : vector<1x8x128xf32> to vector<8x128xf32>
    %911 = vector.shape_cast %908 : vector<8x128xf32> to vector<1x8x128xf32>
    tpu.vector_store %arg3[%c15_156, %c0_157, %c0_158], %911 {strides = array<i32>} : memref<16x8x128xf32, #tpu.memory_space<vmem>>, vector<1x8x128xf32>,
    return
  }
  func.func @transform_0(%arg0: i32) -> (i32, i32, i32) {
    %c0_i32 = arith.constant 0 : i32
    %c0_i32_0 = arith.constant 0 : i32
    %c0_i32_1 = arith.constant 0 : i32
    return %c0_i32, %arg0, %c0_i32_0 : i32, i32, i32
  }
  func.func @transform_1(%arg0: i32) -> (i32, i32, i32) {
    %c0_i32 = arith.constant 0 : i32
    %c0_i32_0 = arith.constant 0 : i32
    %c0_i32_1 = arith.constant 0 : i32
    return %c0_i32, %arg0, %c0_i32_0 : i32, i32, i32
  }
  func.func @transform_2(%arg0: i32) -> (i32, i32, i32) {
    %c0_i32 = arith.constant 0 : i32
    %c0_i32_0 = arith.constant 0 : i32
    %c0_i32_1 = arith.constant 0 : i32
    return %c0_i32, %arg0, %c0_i32_0 : i32, i32, i32
  }
}

</mosaic_0001>

<llo_original>
// kernel: ga_inverse_versor.1
$region0: #{ga_inverse_versor.1}
  #allocation0 [shape = 'u32[]', space=smem, size = 0x4, offset = 0x4, fixed_abs, tag = 'smem constant byte address 0x4 - core index']
  #allocation1 [shape = 'u32[72,128]{1,0:T(1,128)}', space=vmem, size = 0x9000, scoped, tag = 'internal scratch']
  %s0 = inlined_call_operand.vmem [shape: f32[16,8,128], index: 0, kind: input, shape index: {}]
  %s1 = inlined_call_operand.vmem [shape: f32[16,8,128], index: 1, kind: input, shape index: {}]
  %s2 = inlined_call_operand.vmem [shape: f32[16,8,128], index: 2, kind: output, shape index: {}]
  %s3 = sld [smem:[#allocation0]]
  $region18: #{ga_inverse_versor.1} parent=0
    _
  %s5 = ssub.s32 1, %s3
  %s6 = scalar_select 0, %s5, %s3
  // Predicated region
  $region2: #{ga_inverse_versor.1} parent=0 // pred_check
    _
  $region3: #{ga_inverse_versor.1} parent=0 // pred_check_branch
    %8 = sbr.rel (0) target = $region5
  $region4: #{ga_inverse_versor.1} parent=0 // pred_region
    _
  $region5: #{ga_inverse_versor.1} parent=0 // pred_fallthru
    _
  // Predicated region
  $region6: #{ga_inverse_versor.1} parent=0 // pred_check
    _
  $region7: #{ga_inverse_versor.1} parent=0 // pred_check_branch
    %10 = sbr.rel (0) target = $region9
  $region8: #{ga_inverse_versor.1} parent=0 // pred_region
    _
  $region9: #{ga_inverse_versor.1} parent=0 // pred_fallthru
    _
  %v11 = vld [vmem:[%s0] sm:$0xff]
  %s12 = scalar_lea.vmem %s0, 8
  %v13 = vld [vmem:[%s12] sm:$0xff]
  %s14 = scalar_lea.vmem %s0, 16
  %v15 = vld [vmem:[%s14] sm:$0xff]
  %s16 = scalar_lea.vmem %s0, 24
  %v17 = vld [vmem:[%s16] sm:$0xff]
  %s18 = scalar_lea.vmem %s0, 32
  %v19 = vld [vmem:[%s18] sm:$0xff]
  %s20 = scalar_lea.vmem %s0, 40
  %v21 = vld [vmem:[%s20] sm:$0xff]
  %s22 = scalar_lea.vmem %s0, 48
  %v23 = vld [vmem:[%s22] sm:$0xff]
  %s24 = scalar_lea.vmem %s0, 56
  %v25 = vld [vmem:[%s24] sm:$0xff]
  %s26 = scalar_lea.vmem %s0, 64
  %v27 = vld [vmem:[%s26] sm:$0xff]
  %s28 = scalar_lea.vmem %s0, 72
  %v29 = vld [vmem:[%s28] sm:$0xff]
  %s30 = scalar_lea.vmem %s0, 80
  %v31 = vld [vmem:[%s30] sm:$0xff]
  %s32 = scalar_lea.vmem %s0, 88
  %v33 = vld [vmem:[%s32] sm:$0xff]
  %s34 = scalar_lea.vmem %s0, 96
  %v35 = vld [vmem:[%s34] sm:$0xff]
  %s36 = scalar_lea.vmem %s0, 104
  %v37 = vld [vmem:[%s36] sm:$0xff]
  %s38 = scalar_lea.vmem %s0, 112
  %v39 = vld [vmem:[%s38] sm:$0xff]
  %s40 = scalar_lea.vmem %s0, 120
  %v41 = vld [vmem:[%s40] sm:$0xff]
  %v42 = vld [vmem:[%s1] sm:$0xff]
  %s43 = scalar_lea.vmem %s1, 8
  %v44 = vld [vmem:[%s43] sm:$0xff]
  %s45 = scalar_lea.vmem %s1, 16
  %v46 = vld [vmem:[%s45] sm:$0xff]
  %s47 = scalar_lea.vmem %s1, 24
  %v48 = vld [vmem:[%s47] sm:$0xff]
  %s49 = scalar_lea.vmem %s1, 32
  %v50 = vld [vmem:[%s49] sm:$0xff]
  %s51 = scalar_lea.vmem %s1, 40
  %v52 = vld [vmem:[%s51] sm:$0xff]
  %s53 = scalar_lea.vmem %s1, 48
  %v54 = vld [vmem:[%s53] sm:$0xff]
  %s55 = scalar_lea.vmem %s1, 56
  %v56 = vld [vmem:[%s55] sm:$0xff]
  %s57 = scalar_lea.vmem %s1, 64
  %v58 = vld [vmem:[%s57] sm:$0xff]
  %s59 = scalar_lea.vmem %s1, 72
  %v60 = vld [vmem:[%s59] sm:$0xff]
  %s61 = scalar_lea.vmem %s1, 80
  %v62 = vld [vmem:[%s61] sm:$0xff]
  %s63 = scalar_lea.vmem %s1, 88
  %v64 = vld [vmem:[%s63] sm:$0xff]
  %s65 = scalar_lea.vmem %s1, 96
  %v66 = vld [vmem:[%s65] sm:$0xff]
  %s67 = scalar_lea.vmem %s1, 104
  %v68 = vld [vmem:[%s67] sm:$0xff]
  %s69 = scalar_lea.vmem %s1, 112
  %v70 = vld [vmem:[%s69] sm:$0xff]
  %s71 = scalar_lea.vmem %s1, 120
  %v72 = vld [vmem:[%s71] sm:$0xff]
  %v73 = vmul.f32 %v42, %v11
  %v74 = vadd.f32 %v73, 0.0
  %v75 = vmul.f32 %v46, %v15
  %v76 = vadd.f32 %v74, %v75
  %v77 = vmul.f32 %v48, %v17
  %v78 = vadd.f32 %v76, %v77
  %v79 = vmul.f32 %v50, %v19
  %v80 = vadd.f32 %v78, %v79
  %v81 = vmul.f32 %v58, %v27
  %v82 = vadd.f32 %v80, %v81
  %v83 = vmul.f32 %v60, %v29
  %v84 = vadd.f32 %v82, %v83
  %v85 = vmul.f32 %v62, %v31
  %v86 = vadd.f32 %v84, %v85
  %v87 = vmul.f32 %v70, %v39
  %v88 = vadd.f32 %v86, %v87
  %v89 = vmul.f32 %v42, %v13
  %v90 = vadd.f32 %v89, 0.0
  %v91 = vmul.f32 %v44, %v11
  %v92 = vadd.f32 %v90, %v91
  %v93 = vmul.f32 %v46, %v21
  %v94 = vsub.f32 %v92, %v93
  %v95 = vmul.f32 %v48, %v23
  %v96 = vsub.f32 %v94, %v95
  %v97 = vmul.f32 %v50, %v25
  %v98 = vsub.f32 %v96, %v97
  %v99 = vmul.f32 %v52, %v15
  %v100 = vsub.f32 %v98, %v99
  %v101 = vmul.f32 %v54, %v17
  %v102 = vsub.f32 %v100, %v101
  %v103 = vmul.f32 %v56, %v19
  %v104 = vsub.f32 %v102, %v103
  %v105 = vmul.f32 %v58, %v33
  %v106 = vadd.f32 %v104, %v105
  %v107 = vmul.f32 %v60, %v35
  %v108 = vadd.f32 %v106, %v107
  %v109 = vmul.f32 %v62, %v37
  %v110 = vadd.f32 %v108, %v109
  %v111 = vmul.f32 %v64, %v27
  %v112 = vadd.f32 %v110, %v111
  %v113 = vmul.f32 %v66, %v29
  %v114 = vadd.f32 %v112, %v113
  %v115 = vmul.f32 %v68, %v31
  %v116 = vadd.f32 %v114, %v115
  %v117 = vmul.f32 %v70, %v41
  %v118 = vsub.f32 %v116, %v117
  %v119 = vmul.f32 %v72, %v39
  %v120 = vsub.f32 %v118, %v119
  %v121 = vmul.f32 %v42, %v15
  %v122 = vadd.f32 %v121, 0.0
  %v123 = vmul.f32 %v46, %v11
  %v124 = vadd.f32 %v122, %v123
  %v125 = vmul.f32 %v48, %v27
  %v126 = vsub.f32 %v124, %v125
  %v127 = vmul.f32 %v50, %v29
  %v128 = vsub.f32 %v126, %v127
  %v129 = vmul.f32 %v58, %v17
  %v130 = vsub.f32 %v128, %v129
  %v131 = vmul.f32 %v60, %v19
  %v132 = vsub.f32 %v130, %v131
  %v133 = vmul.f32 %v62, %v39
  %v134 = vadd.f32 %v132, %v133
  %v135 = vmul.f32 %v70, %v31
  %v136 = vadd.f32 %v134, %v135
  %v137 = vmul.f32 %v42, %v17
  %v138 = vadd.f32 %v137, 0.0
  %v139 = vmul.f32 %v46, %v27
  %v140 = vadd.f32 %v138, %v139
  %v141 = vmul.f32 %v48, %v11
  %v142 = vadd.f32 %v140, %v141
  %v143 = vmul.f32 %v50, %v31
  %v144 = vsub.f32 %v142, %v143
  %v145 = vmul.f32 %v58, %v15
  %v146 = vadd.f32 %v144, %v145
  %v147 = vmul.f32 %v60, %v39
  %v148 = vsub.f32 %v146, %v147
  %v149 = vmul.f32 %v62, %v19
  %v150 = vsub.f32 %v148, %v149
  %v151 = vmul.f32 %v70, %v29
  %v152 = vsub.f32 %v150, %v151
  %v153 = vmul.f32 %v42, %v19
  %v154 = vadd.f32 %v153, 0.0
  %v155 = vmul.f32 %v46, %v29
  %v156 = vadd.f32 %v154, %v155
  %v157 = vmul.f32 %v48, %v31
  %v158 = vadd.f32 %v156, %v157
  %v159 = vmul.f32 %v50, %v11
  %v160 = vadd.f32 %v158, %v159
  %v161 = vmul.f32 %v58, %v39
  %v162 = vadd.f32 %v160, %v161
  %v163 = vmul.f32 %v60, %v15
  %v164 = vadd.f32 %v162, %v163
  %v165 = vmul.f32 %v62, %v17
  %v166 = vadd.f32 %v164, %v165
  %v167 = vmul.f32 %v70, %v27
  %v168 = vadd.f32 %v166, %v167
  %v169 = vmul.f32 %v42, %v21
  %v170 = vadd.f32 %v169, 0.0
  %v171 = vmul.f32 %v44, %v15
  %v172 = vadd.f32 %v170, %v171
  %v173 = vmul.f32 %v46, %v13
  %v174 = vsub.f32 %v172, %v173
  %v175 = vmul.f32 %v48, %v33
  %v176 = vadd.f32 %v174, %v175
  %v177 = vmul.f32 %v50, %v35
  %v178 = vadd.f32 %v176, %v177
  %v179 = vmul.f32 %v52, %v11
  %v180 = vsub.f32 %v178, %v179
  %v181 = vmul.f32 %v54, %v27
  %v182 = vadd.f32 %v180, %v181
  %v183 = vmul.f32 %v56, %v29
  %v184 = vadd.f32 %v182, %v183
  %v185 = vmul.f32 %v58, %v23
  %v186 = vsub.f32 %v184, %v185
  %v187 = vmul.f32 %v60, %v25
  %v188 = vsub.f32 %v186, %v187
  %v189 = vmul.f32 %v62, %v41
  %v190 = vadd.f32 %v188, %v189
  %v191 = vmul.f32 %v64, %v17
  %v192 = vsub.f32 %v190, %v191
  %v193 = vmul.f32 %v66, %v19
  %v194 = vsub.f32 %v192, %v193
  %v195 = vmul.f32 %v68, %v39
  %v196 = vadd.f32 %v194, %v195
  %v197 = vmul.f32 %v70, %v37
  %v198 = vsub.f32 %v196, %v197
  %v199 = vmul.f32 %v72, %v31
  %v200 = vsub.f32 %v198, %v199
  %v201 = vmul.f32 %v42, %v23
  %v202 = vadd.f32 %v201, 0.0
  %v203 = vmul.f32 %v44, %v17
  %v204 = vadd.f32 %v202, %v203
  %v205 = vmul.f32 %v46, %v33
  %v206 = vsub.f32 %v204, %v205
  %v207 = vmul.f32 %v48, %v13
  %v208 = vsub.f32 %v206, %v207
  %v209 = vmul.f32 %v50, %v37
  %v210 = vadd.f32 %v208, %v209
  %v211 = vmul.f32 %v52, %v27
  %v212 = vsub.f32 %v210, %v211
  %v213 = vmul.f32 %v54, %v11
  %v214 = vsub.f32 %v212, %v213
  %v215 = vmul.f32 %v56, %v31
  %v216 = vadd.f32 %v214, %v215
  %v217 = vmul.f32 %v58, %v21
  %v218 = vadd.f32 %v216, %v217
  %v219 = vmul.f32 %v60, %v41
  %v220 = vsub.f32 %v218, %v219
  %v221 = vmul.f32 %v62, %v25
  %v222 = vsub.f32 %v220, %v221
  %v223 = vmul.f32 %v64, %v15
  %v224 = vadd.f32 %v222, %v223
  %v225 = vmul.f32 %v66, %v39
  %v226 = vsub.f32 %v224, %v225
  %v227 = vmul.f32 %v68, %v19
  %v228 = vsub.f32 %v226, %v227
  %v229 = vmul.f32 %v70, %v35
  %v230 = vadd.f32 %v228, %v229
  %v231 = vmul.f32 %v72, %v29
  %v232 = vadd.f32 %v230, %v231
  %v233 = vmul.f32 %v42, %v25
  %v234 = vadd.f32 %v233, 0.0
  %v235 = vmul.f32 %v44, %v19
  %v236 = vadd.f32 %v234, %v235
  %v237 = vmul.f32 %v46, %v35
  %v238 = vsub.f32 %v236, %v237
  %v239 = vmul.f32 %v48, %v37
  %v240 = vsub.f32 %v238, %v239
  %v241 = vmul.f32 %v50, %v13
  %v242 = vsub.f32 %v240, %v241
  %v243 = vmul.f32 %v52, %v29
  %v244 = vsub.f32 %v242, %v243
  %v245 = vmul.f32 %v54, %v31
  %v246 = vsub.f32 %v244, %v245
  %v247 = vmul.f32 %v56, %v11
  %v248 = vsub.f32 %v246, %v247
  %v249 = vmul.f32 %v58, %v41
  %v250 = vadd.f32 %v248, %v249
  %v251 = vmul.f32 %v60, %v21
  %v252 = vadd.f32 %v250, %v251
  %v253 = vmul.f32 %v62, %v23
  %v254 = vadd.f32 %v252, %v253
  %v255 = vmul.f32 %v64, %v39
  %v256 = vadd.f32 %v254, %v255
  %v257 = vmul.f32 %v66, %v15
  %v258 = vadd.f32 %v256, %v257
  %v259 = vmul.f32 %v68, %v17
  %v260 = vadd.f32 %v258, %v259
  %v261 = vmul.f32 %v70, %v33
  %v262 = vsub.f32 %v260, %v261
  %v263 = vmul.f32 %v72, %v27
  %v264 = vsub.f32 %v262, %v263
  %v265 = vmul.f32 %v42, %v27
  %v266 = vadd.f32 %v265, 0.0
  %v267 = vmul.f32 %v46, %v17
  %v268 = vadd.f32 %v266, %v267
  %v269 = vmul.f32 %v48, %v15
  %v270 = vsub.f32 %v268, %v269
  %v271 = vmul.f32 %v50, %v39
  %v272 = vadd.f32 %v270, %v271
  %v273 = vmul.f32 %v58, %v11
  %v274 = vsub.f32 %v272, %v273
  %v275 = vmul.f32 %v60, %v31
  %v276 = vadd.f32 %v274, %v275
  %v277 = vmul.f32 %v62, %v29
  %v278 = vsub.f32 %v276, %v277
  %v279 = vmul.f32 %v70, %v19
  %v280 = vsub.f32 %v278, %v279
  %v281 = vmul.f32 %v42, %v29
  %v282 = vadd.f32 %v281, 0.0
  %v283 = vmul.f32 %v46, %v19
  %v284 = vadd.f32 %v282, %v283
  %v285 = vmul.f32 %v48, %v39
  %v286 = vsub.f32 %v284, %v285
  %v287 = vmul.f32 %v50, %v15
  %v288 = vsub.f32 %v286, %v287
  %v289 = vmul.f32 %v58, %v31
  %v290 = vsub.f32 %v288, %v289
  %v291 = vmul.f32 %v60, %v11
  %v292 = vsub.f32 %v290, %v291
  %v293 = vmul.f32 %v62, %v27
  %v294 = vadd.f32 %v292, %v293
  %v295 = vmul.f32 %v70, %v17
  %v296 = vadd.f32 %v294, %v295
  %v297 = vmul.f32 %v42, %v31
  %v298 = vadd.f32 %v297, 0.0
  %v299 = vmul.f32 %v46, %v39
  %v300 = vadd.f32 %v298, %v299
  %v301 = vmul.f32 %v48, %v19
  %v302 = vadd.f32 %v300, %v301
  %v303 = vmul.f32 %v50, %v17
  %v304 = vsub.f32 %v302, %v303
  %v305 = vmul.f32 %v58, %v29
  %v306 = vadd.f32 %v304, %v305
  %v307 = vmul.f32 %v60, %v27
  %v308 = vsub.f32 %v306, %v307
  %v309 = vmul.f32 %v62, %v11
  %v310 = vsub.f32 %v308, %v309
  %v311 = vmul.f32 %v70, %v15
  %v312 = vsub.f32 %v310, %v311
  %v313 = vmul.f32 %v42, %v33
  %v314 = vadd.f32 %v313, 0.0
  %v315 = vmul.f32 %v44, %v27
  %v316 = vadd.f32 %v314, %v315
  %v317 = vmul.f32 %v46, %v23
  %v318 = vsub.f32 %v316, %v317
  %v319 = vmul.f32 %v48, %v21
  %v320 = vadd.f32 %v318, %v319
  %v321 = vmul.f32 %v50, %v41
  %v322 = vsub.f32 %v320, %v321
  %v323 = vmul.f32 %v52, %v17
  %v324 = vsub.f32 %v322, %v323
  %v325 = vmul.f32 %v54, %v15
  %v326 = vadd.f32 %v324, %v325
  %v327 = vmul.f32 %v56, %v39
  %v328 = vsub.f32 %v326, %v327
  %v329 = vmul.f32 %v58, %v13
  %v330 = vsub.f32 %v328, %v329
  %v331 = vmul.f32 %v60, %v37
  %v332 = vadd.f32 %v330, %v331
  %v333 = vmul.f32 %v62, %v35
  %v334 = vsub.f32 %v332, %v333
  %v335 = vmul.f32 %v64, %v11
  %v336 = vsub.f32 %v334, %v335
  %v337 = vmul.f32 %v66, %v31
  %v338 = vadd.f32 %v336, %v337
  %v339 = vmul.f32 %v68, %v29
  %v340 = vsub.f32 %v338, %v339
  %v341 = vmul.f32 %v70, %v25
  %v342 = vadd.f32 %v340, %v341
  %v343 = vmul.f32 %v72, %v19
  %v344 = vadd.f32 %v342, %v343
  %v345 = vmul.f32 %v42, %v35
  %v346 = vadd.f32 %v345, 0.0
  %v347 = vmul.f32 %v44, %v29
  %v348 = vadd.f32 %v346, %v347
  %v349 = vmul.f32 %v46, %v25
  %v350 = vsub.f32 %v348, %v349
  %v351 = vmul.f32 %v48, %v41
  %v352 = vadd.f32 %v350, %v351
  %v353 = vmul.f32 %v50, %v21
  %v354 = vadd.f32 %v352, %v353
  %v355 = vmul.f32 %v52, %v19
  %v356 = vsub.f32 %v354, %v355
  %v357 = vmul.f32 %v54, %v39
  %v358 = vadd.f32 %v356, %v357
  %v359 = vmul.f32 %v56, %v15
  %v360 = vadd.f32 %v358, %v359
  %v361 = vmul.f32 %v58, %v37
  %v362 = vsub.f32 %v360, %v361
  %v363 = vmul.f32 %v60, %v13
  %v364 = vsub.f32 %v362, %v363
  %v365 = vmul.f32 %v62, %v33
  %v366 = vadd.f32 %v364, %v365
  %v367 = vmul.f32 %v64, %v31
  %v368 = vsub.f32 %v366, %v367
  %v369 = vmul.f32 %v66, %v11
  %v370 = vsub.f32 %v368, %v369
  %v371 = vmul.f32 %v68, %v27
  %v372 = vadd.f32 %v370, %v371
  %v373 = vmul.f32 %v70, %v23
  %v374 = vsub.f32 %v372, %v373
  %v375 = vmul.f32 %v72, %v17
  %v376 = vsub.f32 %v374, %v375
  %v377 = vmul.f32 %v42, %v37
  %v378 = vadd.f32 %v377, 0.0
  %v379 = vmul.f32 %v44, %v31
  %v380 = vadd.f32 %v378, %v379
  %v381 = vmul.f32 %v46, %v41
  %v382 = vsub.f32 %v380, %v381
  %v383 = vmul.f32 %v48, %v25
  %v384 = vsub.f32 %v382, %v383
  %v385 = vmul.f32 %v50, %v23
  %v386 = vadd.f32 %v384, %v385
  %v387 = vmul.f32 %v52, %v39
  %v388 = vsub.f32 %v386, %v387
  %v389 = vmul.f32 %v54, %v19
  %v390 = vsub.f32 %v388, %v389
  %v391 = vmul.f32 %v56, %v17
  %v392 = vadd.f32 %v390, %v391
  %v393 = vmul.f32 %v58, %v35
  %v394 = vadd.f32 %v392, %v393
  %v395 = vmul.f32 %v60, %v33
  %v396 = vsub.f32 %v394, %v395
  %v397 = vmul.f32 %v62, %v13
  %v398 = vsub.f32 %v396, %v397
  %v399 = vmul.f32 %v64, %v29
  %v400 = vadd.f32 %v398, %v399
  %v401 = vmul.f32 %v66, %v27
  %v402 = vsub.f32 %v400, %v401
  %v403 = vmul.f32 %v68, %v11
  %v404 = vsub.f32 %v402, %v403
  %v405 = vmul.f32 %v70, %v21
  %v406 = vadd.f32 %v404, %v405
  %v407 = vmul.f32 %v72, %v15
  %v408 = vadd.f32 %v406, %v407
  %v409 = vmul.f32 %v42, %v39
  %v410 = vadd.f32 %v409, 0.0
  %v411 = vmul.f32 %v46, %v31
  %v412 = vadd.f32 %v410, %v411
  %v413 = vmul.f32 %v48, %v29
  %v414 = vsub.f32 %v412, %v413
  %v415 = vmul.f32 %v50, %v27
  %v416 = vadd.f32 %v414, %v415
  %v417 = vmul.f32 %v58, %v19
  %v418 = vsub.f32 %v416, %v417
  %v419 = vmul.f32 %v60, %v17
  %v420 = vadd.f32 %v418, %v419
  %v421 = vmul.f32 %v62, %v15
  %v422 = vsub.f32 %v420, %v421
  %v423 = vmul.f32 %v70, %v11
  %v424 = vsub.f32 %v422, %v423
  %v425 = vmul.f32 %v42, %v41
  %v426 = vadd.f32 %v425, 0.0
  %v427 = vmul.f32 %v44, %v39
  %v428 = vadd.f32 %v426, %v427
  %v429 = vmul.f32 %v46, %v37
  %v430 = vsub.f32 %v428, %v429
  %v431 = vmul.f32 %v48, %v35
  %v432 = vadd.f32 %v430, %v431
  %v433 = vmul.f32 %v50, %v33
  %v434 = vsub.f32 %v432, %v433
  %v435 = vmul.f32 %v52, %v31
  %v436 = vsub.f32 %v434, %v435
  %v437 = vmul.f32 %v54, %v29
  %v438 = vadd.f32 %v436, %v437
  %v439 = vmul.f32 %v56, %v27
  %v440 = vsub.f32 %v438, %v439
  %v441 = vmul.f32 %v58, %v25
  %v442 = vsub.f32 %v440, %v441
  %v443 = vmul.f32 %v60, %v23
  %v444 = vadd.f32 %v442, %v443
  %v445 = vmul.f32 %v62, %v21
  %v446 = vsub.f32 %v444, %v445
  %v447 = vmul.f32 %v64, %v19
  %v448 = vsub.f32 %v446, %v447
  %v449 = vmul.f32 %v66, %v17
  %v450 = vadd.f32 %v448, %v449
  %v451 = vmul.f32 %v68, %v15
  %v452 = vsub.f32 %v450, %v451
  %v453 = vmul.f32 %v70, %v13
  %v454 = vadd.f32 %v452, %v453
  %v455 = vmul.f32 %v72, %v11
  %v456 = vadd.f32 %v454, %v455
  %v457 = vmul.f32 %v88, %v42
  %v458 = vadd.f32 %v457, 0.0
  %v459 = vmul.f32 %v136, %v46
  %v460 = vadd.f32 %v458, %v459
  %v461 = vmul.f32 %v152, %v48
  %v462 = vadd.f32 %v460, %v461
  %v463 = vmul.f32 %v168, %v50
  %v464 = vadd.f32 %v462, %v463
  %v465 = vmul.f32 %v280, %v58
  %v466 = vsub.f32 %v464, %v465
  %v467 = vmul.f32 %v296, %v60
  %v468 = vsub.f32 %v466, %v467
  %v469 = vmul.f32 %v312, %v62
  %v470 = vsub.f32 %v468, %v469
  %v471 = vmul.f32 %v424, %v70
  %v472 = vsub.f32 %v470, %v471
  %473 = vst [vmem:[%s2] sm:$0xff] %v472
  %v474 = vmul.f32 %v88, %v44
  %v475 = vadd.f32 %v474, 0.0
  %v476 = vmul.f32 %v120, %v42
  %v477 = vadd.f32 %v475, %v476
  %v478 = vmul.f32 %v136, %v52
  %v479 = vsub.f32 %v477, %v478
  %v480 = vmul.f32 %v152, %v54
  %v481 = vsub.f32 %v479, %v480
  %v482 = vmul.f32 %v168, %v56
  %v483 = vsub.f32 %v481, %v482
  %v484 = vmul.f32 %v200, %v46
  %v485 = vadd.f32 %v483, %v484
  %v486 = vmul.f32 %v232, %v48
  %v487 = vadd.f32 %v485, %v486
  %v488 = vmul.f32 %v264, %v50
  %v489 = vadd.f32 %v487, %v488
  %v490 = vmul.f32 %v280, %v64
  %v491 = vsub.f32 %v489, %v490
  %v492 = vmul.f32 %v296, %v66
  %v493 = vsub.f32 %v491, %v492
  %v494 = vmul.f32 %v312, %v68
  %v495 = vsub.f32 %v493, %v494
  %v496 = vmul.f32 %v344, %v58
  %v497 = vsub.f32 %v495, %v496
  %v498 = vmul.f32 %v376, %v60
  %v499 = vsub.f32 %v497, %v498
  %v500 = vmul.f32 %v408, %v62
  %v501 = vsub.f32 %v499, %v500
  %v502 = vmul.f32 %v424, %v72
  %v503 = vadd.f32 %v501, %v502
  %v504 = vmul.f32 %v456, %v70
  %v505 = vsub.f32 %v503, %v504
  %s506 = scalar_lea.vmem %s2, 8
  %507 = vst [vmem:[%s506] sm:$0xff] %v505
  %v508 = vmul.f32 %v88, %v46
  %v509 = vadd.f32 %v508, 0.0
  %v510 = vmul.f32 %v136, %v42
  %v511 = vadd.f32 %v509, %v510
  %v512 = vmul.f32 %v152, %v58
  %v513 = vsub.f32 %v511, %v512
  %v514 = vmul.f32 %v168, %v60
  %v515 = vsub.f32 %v513, %v514
  %v516 = vmul.f32 %v280, %v48
  %v517 = vadd.f32 %v515, %v516
  %v518 = vmul.f32 %v296, %v50
  %v519 = vadd.f32 %v517, %v518
  %v520 = vmul.f32 %v312, %v70
  %v521 = vsub.f32 %v519, %v520
  %v522 = vmul.f32 %v424, %v62
  %v523 = vsub.f32 %v521, %v522
  %s524 = scalar_lea.vmem %s2, 16
  %525 = vst [vmem:[%s524] sm:$0xff] %v523
  %v526 = vmul.f32 %v88, %v48
  %v527 = vadd.f32 %v526, 0.0
  %v528 = vmul.f32 %v136, %v58
  %v529 = vadd.f32 %v527, %v528
  %v530 = vmul.f32 %v152, %v42
  %v531 = vadd.f32 %v529, %v530
  %v532 = vmul.f32 %v168, %v62
  %v533 = vsub.f32 %v531, %v532
  %v534 = vmul.f32 %v280, %v46
  %v535 = vsub.f32 %v533, %v534
  %v536 = vmul.f32 %v296, %v70
  %v537 = vadd.f32 %v535, %v536
  %v538 = vmul.f32 %v312, %v50
  %v539 = vadd.f32 %v537, %v538
  %v540 = vmul.f32 %v424, %v60
  %v541 = vadd.f32 %v539, %v540
  %s542 = scalar_lea.vmem %s2, 24
  %543 = vst [vmem:[%s542] sm:$0xff] %v541
  %v544 = vmul.f32 %v88, %v50
  %v545 = vadd.f32 %v544, 0.0
  %v546 = vmul.f32 %v136, %v60
  %v547 = vadd.f32 %v545, %v546
  %v548 = vmul.f32 %v152, %v62
  %v549 = vadd.f32 %v547, %v548
  %v550 = vmul.f32 %v168, %v42
  %v551 = vadd.f32 %v549, %v550
  %v552 = vmul.f32 %v280, %v70
  %v553 = vsub.f32 %v551, %v552
  %v554 = vmul.f32 %v296, %v46
  %v555 = vsub.f32 %v553, %v554
  %v556 = vmul.f32 %v312, %v48
  %v557 = vsub.f32 %v555, %v556
  %v558 = vmul.f32 %v424, %v58
  %v559 = vsub.f32 %v557, %v558
  %s560 = scalar_lea.vmem %s2, 32
  %561 = vst [vmem:[%s560] sm:$0xff] %v559
  %v562 = vmul.f32 %v88, %v52
  %v563 = vadd.f32 %v562, 0.0
  %v564 = vmul.f32 %v120, %v46
  %v565 = vadd.f32 %v563, %v564
  %v566 = vmul.f32 %v136, %v44
  %v567 = vsub.f32 %v565, %v566
  %v568 = vmul.f32 %v152, %v64
  %v569 = vadd.f32 %v567, %v568
  %v570 = vmul.f32 %v168, %v66
  %v571 = vadd.f32 %v569, %v570
  %v572 = vmul.f32 %v200, %v42
  %v573 = vadd.f32 %v571, %v572
  %v574 = vmul.f32 %v232, %v58
  %v575 = vsub.f32 %v573, %v574
  %v576 = vmul.f32 %v264, %v60
  %v577 = vsub.f32 %v575, %v576
  %v578 = vmul.f32 %v280, %v54
  %v579 = vadd.f32 %v577, %v578
  %v580 = vmul.f32 %v296, %v56
  %v581 = vadd.f32 %v579, %v580
  %v582 = vmul.f32 %v312, %v72
  %v583 = vsub.f32 %v581, %v582
  %v584 = vmul.f32 %v344, %v48
  %v585 = vadd.f32 %v583, %v584
  %v586 = vmul.f32 %v376, %v50
  %v587 = vadd.f32 %v585, %v586
  %v588 = vmul.f32 %v408, %v70
  %v589 = vsub.f32 %v587, %v588
  %v590 = vmul.f32 %v424, %v68
  %v591 = vadd.f32 %v589, %v590
  %v592 = vmul.f32 %v456, %v62
  %v593 = vsub.f32 %v591, %v592
  %s594 = scalar_lea.vmem %s2, 40
  %595 = vst [vmem:[%s594] sm:$0xff] %v593
  %v596 = vmul.f32 %v88, %v54
  %v597 = vadd.f32 %v596, 0.0
  %v598 = vmul.f32 %v120, %v48
  %v599 = vadd.f32 %v597, %v598
  %v600 = vmul.f32 %v136, %v64
  %v601 = vsub.f32 %v599, %v600
  %v602 = vmul.f32 %v152, %v44
  %v603 = vsub.f32 %v601, %v602
  %v604 = vmul.f32 %v168, %v68
  %v605 = vadd.f32 %v603, %v604
  %v606 = vmul.f32 %v200, %v58
  %v607 = vadd.f32 %v605, %v606
  %v608 = vmul.f32 %v232, %v42
  %v609 = vadd.f32 %v607, %v608
  %v610 = vmul.f32 %v264, %v62
  %v611 = vsub.f32 %v609, %v610
  %v612 = vmul.f32 %v280, %v52
  %v613 = vsub.f32 %v611, %v612
  %v614 = vmul.f32 %v296, %v72
  %v615 = vadd.f32 %v613, %v614
  %v616 = vmul.f32 %v312, %v56
  %v617 = vadd.f32 %v615, %v616
  %v618 = vmul.f32 %v344, %v46
  %v619 = vsub.f32 %v617, %v618
  %v620 = vmul.f32 %v376, %v70
  %v621 = vadd.f32 %v619, %v620
  %v622 = vmul.f32 %v408, %v50
  %v623 = vadd.f32 %v621, %v622
  %v624 = vmul.f32 %v424, %v66
  %v625 = vsub.f32 %v623, %v624
  %v626 = vmul.f32 %v456, %v60
  %v627 = vadd.f32 %v625, %v626
  %s628 = scalar_lea.vmem %s2, 48
  %629 = vst [vmem:[%s628] sm:$0xff] %v627
  %v630 = vmul.f32 %v88, %v56
  %v631 = vadd.f32 %v630, 0.0
  %v632 = vmul.f32 %v120, %v50
  %v633 = vadd.f32 %v631, %v632
  %v634 = vmul.f32 %v136, %v66
  %v635 = vsub.f32 %v633, %v634
  %v636 = vmul.f32 %v152, %v68
  %v637 = vsub.f32 %v635, %v636
  %v638 = vmul.f32 %v168, %v44
  %v639 = vsub.f32 %v637, %v638
  %v640 = vmul.f32 %v200, %v60
  %v641 = vadd.f32 %v639, %v640
  %v642 = vmul.f32 %v232, %v62
  %v643 = vadd.f32 %v641, %v642
  %v644 = vmul.f32 %v264, %v42
  %v645 = vadd.f32 %v643, %v644
  %v646 = vmul.f32 %v280, %v72
  %v647 = vsub.f32 %v645, %v646
  %v648 = vmul.f32 %v296, %v52
  %v649 = vsub.f32 %v647, %v648
  %v650 = vmul.f32 %v312, %v54
  %v651 = vsub.f32 %v649, %v650
  %v652 = vmul.f32 %v344, %v70
  %v653 = vsub.f32 %v651, %v652
  %v654 = vmul.f32 %v376, %v46
  %v655 = vsub.f32 %v653, %v654
  %v656 = vmul.f32 %v408, %v48
  %v657 = vsub.f32 %v655, %v656
  %v658 = vmul.f32 %v424, %v64
  %v659 = vadd.f32 %v657, %v658
  %v660 = vmul.f32 %v456, %v58
  %v661 = vsub.f32 %v659, %v660
  %s662 = scalar_lea.vmem %s2, 56
  %663 = vst [vmem:[%s662] sm:$0xff] %v661
  %v664 = vmul.f32 %v88, %v58
  %v665 = vadd.f32 %v664, 0.0
  %v666 = vmul.f32 %v136, %v48
  %v667 = vadd.f32 %v665, %v666
  %v668 = vmul.f32 %v152, %v46
  %v669 = vsub.f32 %v667, %v668
  %v670 = vmul.f32 %v168, %v70
  %v671 = vadd.f32 %v669, %v670
  %v672 = vmul.f32 %v280, %v42
  %v673 = vadd.f32 %v671, %v672
  %v674 = vmul.f32 %v296, %v62
  %v675 = vsub.f32 %v673, %v674
  %v676 = vmul.f32 %v312, %v60
  %v677 = vadd.f32 %v675, %v676
  %v678 = vmul.f32 %v424, %v50
  %v679 = vadd.f32 %v677, %v678
  %s680 = scalar_lea.vmem %s2, 64
  %681 = vst [vmem:[%s680] sm:$0xff] %v679
  %v682 = vmul.f32 %v88, %v60
  %v683 = vadd.f32 %v682, 0.0
  %v684 = vmul.f32 %v136, %v50
  %v685 = vadd.f32 %v683, %v684
  %v686 = vmul.f32 %v152, %v70
  %v687 = vsub.f32 %v685, %v686
  %v688 = vmul.f32 %v168, %v46
  %v689 = vsub.f32 %v687, %v688
  %v690 = vmul.f32 %v280, %v62
  %v691 = vadd.f32 %v689, %v690
  %v692 = vmul.f32 %v296, %v42
  %v693 = vadd.f32 %v691, %v692
  %v694 = vmul.f32 %v312, %v58
  %v695 = vsub.f32 %v693, %v694
  %v696 = vmul.f32 %v424, %v48
  %v697 = vsub.f32 %v695, %v696
  %s698 = scalar_lea.vmem %s2, 72
  %699 = vst [vmem:[%s698] sm:$0xff] %v697
  %v700 = vmul.f32 %v88, %v62
  %v701 = vadd.f32 %v700, 0.0
  %v702 = vmul.f32 %v136, %v70
  %v703 = vadd.f32 %v701, %v702
  %v704 = vmul.f32 %v152, %v50
  %v705 = vadd.f32 %v703, %v704
  %v706 = vmul.f32 %v168, %v48
  %v707 = vsub.f32 %v705, %v706
  %v708 = vmul.f32 %v280, %v60
  %v709 = vsub.f32 %v707, %v708
  %v710 = vmul.f32 %v296, %v58
  %v711 = vadd.f32 %v709, %v710
  %v712 = vmul.f32 %v312, %v42
  %v713 = vadd.f32 %v711, %v712
  %v714 = vmul.f32 %v424, %v46
  %v715 = vadd.f32 %v713, %v714
  %s716 = scalar_lea.vmem %s2, 80
  %717 = vst [vmem:[%s716] sm:$0xff] %v715
  %v718 = vmul.f32 %v88, %v64
  %v719 = vadd.f32 %v718, 0.0
  %v720 = vmul.f32 %v120, %v58
  %v721 = vadd.f32 %v719, %v720
  %v722 = vmul.f32 %v136, %v54
  %v723 = vsub.f32 %v721, %v722
  %v724 = vmul.f32 %v152, %v52
  %v725 = vadd.f32 %v723, %v724
  %v726 = vmul.f32 %v168, %v72
  %v727 = vsub.f32 %v725, %v726
  %v728 = vmul.f32 %v200, %v48
  %v729 = vadd.f32 %v727, %v728
  %v730 = vmul.f32 %v232, %v46
  %v731 = vsub.f32 %v729, %v730
  %v732 = vmul.f32 %v264, %v70
  %v733 = vadd.f32 %v731, %v732
  %v734 = vmul.f32 %v280, %v44
  %v735 = vadd.f32 %v733, %v734
  %v736 = vmul.f32 %v296, %v68
  %v737 = vsub.f32 %v735, %v736
  %v738 = vmul.f32 %v312, %v66
  %v739 = vadd.f32 %v737, %v738
  %v740 = vmul.f32 %v344, %v42
  %v741 = vadd.f32 %v739, %v740
  %v742 = vmul.f32 %v376, %v62
  %v743 = vsub.f32 %v741, %v742
  %v744 = vmul.f32 %v408, %v60
  %v745 = vadd.f32 %v743, %v744
  %v746 = vmul.f32 %v424, %v56
  %v747 = vsub.f32 %v745, %v746
  %v748 = vmul.f32 %v456, %v50
  %v749 = vadd.f32 %v747, %v748
  %s750 = scalar_lea.vmem %s2, 88
  %751 = vst [vmem:[%s750] sm:$0xff] %v749
  %v752 = vmul.f32 %v88, %v66
  %v753 = vadd.f32 %v752, 0.0
  %v754 = vmul.f32 %v120, %v60
  %v755 = vadd.f32 %v753, %v754
  %v756 = vmul.f32 %v136, %v56
  %v757 = vsub.f32 %v755, %v756
  %v758 = vmul.f32 %v152, %v72
  %v759 = vadd.f32 %v757, %v758
  %v760 = vmul.f32 %v168, %v52
  %v761 = vadd.f32 %v759, %v760
  %v762 = vmul.f32 %v200, %v50
  %v763 = vadd.f32 %v761, %v762
  %v764 = vmul.f32 %v232, %v70
  %v765 = vsub.f32 %v763, %v764
  %v766 = vmul.f32 %v264, %v46
  %v767 = vsub.f32 %v765, %v766
  %v768 = vmul.f32 %v280, %v68
  %v769 = vadd.f32 %v767, %v768
  %v770 = vmul.f32 %v296, %v44
  %v771 = vadd.f32 %v769, %v770
  %v772 = vmul.f32 %v312, %v64
  %v773 = vsub.f32 %v771, %v772
  %v774 = vmul.f32 %v344, %v62
  %v775 = vadd.f32 %v773, %v774
  %v776 = vmul.f32 %v376, %v42
  %v777 = vadd.f32 %v775, %v776
  %v778 = vmul.f32 %v408, %v58
  %v779 = vsub.f32 %v777, %v778
  %v780 = vmul.f32 %v424, %v54
  %v781 = vadd.f32 %v779, %v780
  %v782 = vmul.f32 %v456, %v48
  %v783 = vsub.f32 %v781, %v782
  %s784 = scalar_lea.vmem %s2, 96
  %785 = vst [vmem:[%s784] sm:$0xff] %v783
  %v786 = vmul.f32 %v88, %v68
  %v787 = vadd.f32 %v786, 0.0
  %v788 = vmul.f32 %v120, %v62
  %v789 = vadd.f32 %v787, %v788
  %v790 = vmul.f32 %v136, %v72
  %v791 = vsub.f32 %v789, %v790
  %v792 = vmul.f32 %v152, %v56
  %v793 = vsub.f32 %v791, %v792
  %v794 = vmul.f32 %v168, %v54
  %v795 = vadd.f32 %v793, %v794
  %v796 = vmul.f32 %v200, %v70
  %v797 = vadd.f32 %v795, %v796
  %v798 = vmul.f32 %v232, %v50
  %v799 = vadd.f32 %v797, %v798
  %v800 = vmul.f32 %v264, %v48
  %v801 = vsub.f32 %v799, %v800
  %v802 = vmul.f32 %v280, %v66
  %v803 = vsub.f32 %v801, %v802
  %v804 = vmul.f32 %v296, %v64
  %v805 = vadd.f32 %v803, %v804
  %v806 = vmul.f32 %v312, %v44
  %v807 = vadd.f32 %v805, %v806
  %v808 = vmul.f32 %v344, %v60
  %v809 = vsub.f32 %v807, %v808
  %v810 = vmul.f32 %v376, %v58
  %v811 = vadd.f32 %v809, %v810
  %v812 = vmul.f32 %v408, %v42
  %v813 = vadd.f32 %v811, %v812
  %v814 = vmul.f32 %v424, %v52
  %v815 = vsub.f32 %v813, %v814
  %v816 = vmul.f32 %v456, %v46
  %v817 = vadd.f32 %v815, %v816
  %s818 = scalar_lea.vmem %s2, 104
  %819 = vst [vmem:[%s818] sm:$0xff] %v817
  %v820 = vmul.f32 %v88, %v70
  %v821 = vadd.f32 %v820, 0.0
  %v822 = vmul.f32 %v136, %v62
  %v823 = vadd.f32 %v821, %v822
  %v824 = vmul.f32 %v152, %v60
  %v825 = vsub.f32 %v823, %v824
  %v826 = vmul.f32 %v168, %v58
  %v827 = vadd.f32 %v825, %v826
  %v828 = vmul.f32 %v280, %v50
  %v829 = vadd.f32 %v827, %v828
  %v830 = vmul.f32 %v296, %v48
  %v831 = vsub.f32 %v829, %v830
  %v832 = vmul.f32 %v312, %v46
  %v833 = vadd.f32 %v831, %v832
  %v834 = vmul.f32 %v424, %v42
  %v835 = vadd.f32 %v833, %v834
  %s836 = scalar_lea.vmem %s2, 112
  %837 = vst [vmem:[%s836] sm:$0xff] %v835
  %v838 = vmul.f32 %v88, %v72
  %v839 = vadd.f32 %v838, 0.0
  %v840 = vmul.f32 %v120, %v70
  %v841 = vadd.f32 %v839, %v840
  %v842 = vmul.f32 %v136, %v68
  %v843 = vsub.f32 %v841, %v842
  %v844 = vmul.f32 %v152, %v66
  %v845 = vadd.f32 %v843, %v844
  %v846 = vmul.f32 %v168, %v64
  %v847 = vsub.f32 %v845, %v846
  %v848 = vmul.f32 %v200, %v62
  %v849 = vadd.f32 %v847, %v848
  %v850 = vmul.f32 %v232, %v60
  %v851 = vsub.f32 %v849, %v850
  %v852 = vmul.f32 %v264, %v58
  %v853 = vadd.f32 %v851, %v852
  %v854 = vmul.f32 %v280, %v56
  %v855 = vadd.f32 %v853, %v854
  %v856 = vmul.f32 %v296, %v54
  %v857 = vsub.f32 %v855, %v856
  %v858 = vmul.f32 %v312, %v52
  %v859 = vadd.f32 %v857, %v858
  %v860 = vmul.f32 %v344, %v50
  %v861 = vadd.f32 %v859, %v860
  %v862 = vmul.f32 %v376, %v48
  %v863 = vsub.f32 %v861, %v862
  %v864 = vmul.f32 %v408, %v46
  %v865 = vadd.f32 %v863, %v864
  %v866 = vmul.f32 %v424, %v44
  %v867 = vsub.f32 %v865, %v866
  %v868 = vmul.f32 %v456, %v42
  %v869 = vadd.f32 %v867, %v868
  %s870 = scalar_lea.vmem %s2, 120
  %871 = vst [vmem:[%s870] sm:$0xff] %v869
  // Predicated region
  $region10: #{ga_inverse_versor.1} parent=0 // pred_check
    _
  $region11: #{ga_inverse_versor.1} parent=0 // pred_check_branch
    %873 = sbr.rel (0) target = $region13
  $region12: #{ga_inverse_versor.1} parent=0 // pred_region
    _
  $region13: #{ga_inverse_versor.1} parent=0 // pred_fallthru
    _
  // Predicated region
  $region14: #{ga_inverse_versor.1} parent=0 // pred_check
    _
  $region15: #{ga_inverse_versor.1} parent=0 // pred_check_branch
    %875 = sbr.rel (0) target = $region17
  $region16: #{ga_inverse_versor.1} parent=0 // pred_region
    _
  $region17: #{ga_inverse_versor.1} parent=0 // pred_fallthru
    _

</llo_original>
